<compile_context>
chip_gen: v7x
topology: tpu7x:2x2x1
jax: 0.10.0
libtpu: 0.0.40
codegen_flags: <defaults>
</compile_context>

<pallas_src>
import jax
import jax.numpy as jnp
from jax import lax
from jax.experimental import pallas as pl
from jax.experimental.pallas import tpu as pltpu

BN_EPS = 1e-5
Z1_DTYPE = jnp.float32   # set to jnp.bfloat16 to halve z1 HBM traffic (~1e-3 deviation)


# --------------------------------------------------------------------------- #
# kernels                                                                      #
# --------------------------------------------------------------------------- #
def _masks(pos_ref, seq_len):
    """Validity of x[j-1] / x[j+1] within each length-L sample (pos precomputed on host)."""
    pos = pos_ref[...]
    return pos >= 1, pos <= seq_len - 2


def _conv3_taps(w_ref, x, m_prev, m_next):
    """k=3, pad=1 conv as three accumulating MXU matmuls on rolled/masked operands."""
    n_cols = x.shape[-1]
    x_prev = pltpu.roll(x, shift=1, axis=1)            # x[j-1] (circular; masked below)
    x_next = pltpu.roll(x, shift=n_cols - 1, axis=1)   # x[j+1]
    z = jnp.dot(w_ref[1], x, preferred_element_type=jnp.float32)
    z = z + jnp.dot(w_ref[0], jnp.where(m_prev, x_prev, 0.0),
                    preferred_element_type=jnp.float32)
    z = z + jnp.dot(w_ref[2], jnp.where(m_next, x_next, 0.0),
                    preferred_element_type=jnp.float32)
    return z


def _write_stats(st_ref, z):
    """Per-tile BN statistics [sum ; sum-of-squares] into one merged (1, 2*C, 1) block."""
    c = z.shape[0]
    st_ref[0, 0:c, :] = jnp.sum(z, axis=1, keepdims=True)
    st_ref[0, c:2 * c, :] = jnp.sum(z * z, axis=1, keepdims=True)


def _make_pass_a_kernel(seq_len):
    """Pass A: z1 = conv1(x); conv1 bias dropped (cancels under training-mode BN)."""
    def kernel(pos_ref, x_ref, w_ref, z_ref, st_ref):
        m_prev, m_next = _masks(pos_ref, seq_len)
        z = _conv3_taps(w_ref, x_ref[...], m_prev, m_next)
        z_ref[...] = z.astype(z_ref.dtype)
        _write_stats(st_ref, z)
    return kernel


def _make_pass_b_kernel(seq_len):
    """Pass B (stats only): statistics of z2 = conv2(relu(bn1(z1))); z2 is NOT written."""
    def kernel(pos_ref, z1_ref, w_ref, sc_ref, sh_ref, st_ref):
        m_prev, m_next = _masks(pos_ref, seq_len)
        y = jnp.maximum(z1_ref[...].astype(jnp.float32) * sc_ref[...] + sh_ref[...], 0.0)
        z = _conv3_taps(w_ref, y, m_prev, m_next)
        _write_stats(st_ref, z)
    return kernel


def _make_pass_c_kernel(seq_len):
    """Pass C: out = relu(bn2(conv2(relu(bn1(z1)))) + conv3(0.5*(maxpool3(x)+avgpool3(x))))."""
    def kernel(pos_ref, z1_ref, x_ref, w2_ref, sc1_ref, sh1_ref, sc2_ref, sh2_ref,
               w3_ref, b3_ref, o_ref):
        m_prev, m_next = _masks(pos_ref, seq_len)

        # main path: recompute z2 from z1 (cheaper than a z2 HBM round trip)
        y = jnp.maximum(z1_ref[...].astype(jnp.float32) * sc1_ref[...] + sh1_ref[...], 0.0)
        z2 = _conv3_taps(w2_ref, y, m_prev, m_next)
        main = z2 * sc2_ref[...] + sh2_ref[...]

        # shortcut path: conv3(0.5*(maxpool3(x) + avgpool3(x)))
        x = x_ref[...]
        n_cols = x.shape[-1]
        x_prev = pltpu.roll(x, shift=1, axis=1)
        x_next = pltpu.roll(x, shift=n_cols - 1, axis=1)
        neg = jnp.float32(-jnp.inf)
        x_max = jnp.maximum(jnp.maximum(jnp.where(m_prev, x_prev, neg), x),
                            jnp.where(m_next, x_next, neg))
        x_avg = (jnp.where(m_prev, x_prev, 0.0) + x +
                 jnp.where(m_next, x_next, 0.0)) * jnp.float32(1.0 / 3.0)
        x_res = 0.5 * (x_max + x_avg)
        shortcut = jnp.dot(w3_ref[...], x_res,
                           preferred_element_type=jnp.float32) + b3_ref[...]

        o_ref[...] = jnp.maximum(main + shortcut, 0.0).astype(o_ref.dtype)
    return kernel


# --------------------------------------------------------------------------- #
# wrapper                                                                      #
# --------------------------------------------------------------------------- #
def _pick_batch_tile(n, seq, bytes_per_col, vmem_budget=12 << 20, max_cols=65536):
    """Largest whole-sample tile with tcols % 128 == 0 (or full extent), within a
    conservative VMEM budget, preferring >= 2 grid steps (feeds both v7x cores)."""
    cols = n * seq
    cap = min(max_cols, vmem_budget // max(bytes_per_col, 1))
    valid = []
    for tn in range(1, n + 1):
        if n % tn:
            continue
        tcols = tn * seq
        if tcols > cap and tn > 1:
            continue
        if tcols == cols or tcols % 128 == 0:
            valid.append(tn)
    if not valid:
        return n                      # last resort: one full-extent tile
    multi = [t for t in valid if (n // t) >= 2]
    return max(multi) if multi else max(valid)


def _fold_bn(stats, count, gamma, beta):
    """Reduce merged per-tile (sum, sumsq) and fold training-mode BN into scale/shift.
    NOTE: E[z^2]-E[z]^2 (clamped) is fine in f32 at these magnitudes; switch to a
    two-pass variance if activations get large-mean at very large `count`."""
    c = gamma.shape[0]
    tot = jnp.sum(stats[:, :, 0], axis=0)     # (2*C,)
    s, q = tot[:c], tot[c:]
    mean = s / count
    var = jnp.maximum(q / count - mean * mean, 0.0)   # biased variance
    scale = gamma * lax.rsqrt(var + BN_EPS)
    shift = beta - mean * scale
    return scale.reshape(c, 1), shift.reshape(c, 1)


@jax.jit
def residual_forward(x, w1, b1, g1, be1, w2, b2, g2, be2, w3, b3):
    """x: (N, C_in, L) float32 -> (N, C_out, L) float32 (training-mode BatchNorm)."""
    del b1, b2   # conv1/conv2 biases cancel exactly under training-mode BatchNorm
    n, c_in, seq = x.shape
    c_out = w1.shape[0]
    cols = n * seq

    # per-column VMEM footprint of the heaviest pass (C): 2x-buffered ins/outs + temps
    bytes_per_col = 4 * (2 * (c_out + c_in) + 2 * c_out + 6 * c_out + 4 * c_in)
    tn = _pick_batch_tile(n, seq, bytes_per_col)
    tcols = tn * seq
    num_tiles = cols // tcols
    grid = (num_tiles,)

    # fold batch into the lane axis: (N, C, L) -> (C, N*L); tiles hold whole samples
    x2 = jnp.transpose(x, (1, 0, 2)).reshape(c_in, cols)

    # per-lane position within a sample; identical for every tile -> constant index_map
    pos = jnp.remainder(lax.broadcasted_iota(jnp.int32, (1, tcols), 1), seq)

    # conv weights pre-split by tap: (C_out, C_in, 3) -> (3, C_out, C_in)
    w1t = jnp.transpose(w1, (2, 0, 1))
    w2t = jnp.transpose(w2, (2, 0, 1))
    w3m = w3[:, :, 0]

    act_spec = lambda c: pl.BlockSpec((c, tcols), lambda i: (0, i))
    pos_spec = pl.BlockSpec((1, tcols), lambda i: (0, 0))
    full_spec = lambda shape: pl.BlockSpec(shape, lambda i: (0,) * len(shape))
    stat_spec = pl.BlockSpec((1, 2 * c_out, 1), lambda i: (i, 0, 0))
    stat_shape = jax.ShapeDtypeStruct((num_tiles, 2 * c_out, 1), jnp.float32)
    params = pltpu.CompilerParams(dimension_semantics=("parallel",),
                                  vmem_limit_bytes=32 << 20)

    # ---- pass A: z1 = conv1(x) + merged per-tile stats ----------------------
    z1, st1 = pl.pallas_call(
        _make_pass_a_kernel(seq),
        grid=grid,
        in_specs=[pos_spec, act_spec(c_in), full_spec((3, c_out, c_in))],
        out_specs=(act_spec(c_out), stat_spec),
        out_shape=(jax.ShapeDtypeStruct((c_out, cols), Z1_DTYPE), stat_shape),
        compiler_params=params,
    )(pos, x2, w1t)
    scale1, shift1 = _fold_bn(st1, cols, g1, be1)

    # ---- pass B: stats of conv2(relu(bn1(z1))) — no large HBM write ---------
    st2 = pl.pallas_call(
        _make_pass_b_kernel(seq),
        grid=grid,
        in_specs=[pos_spec, act_spec(c_out), full_spec((3, c_out, c_out)),
                  full_spec((c_out, 1)), full_spec((c_out, 1))],
        out_specs=stat_spec,
        out_shape=stat_shape,
        compiler_params=params,
    )(pos, z1, w2t, scale1, shift1)
    scale2, shift2 = _fold_bn(st2, cols, g2, be2)

    # ---- pass C: relu(bn2(conv2(relu(bn1(z1)))) + shortcut) ------------------
    out2 = pl.pallas_call(
        _make_pass_c_kernel(seq),
        grid=grid,
        in_specs=[pos_spec, act_spec(c_out), act_spec(c_in),
                  full_spec((3, c_out, c_out)),
                  full_spec((c_out, 1)), full_spec((c_out, 1)),
                  full_spec((c_out, 1)), full_spec((c_out, 1)),
                  full_spec((c_out, c_in)), full_spec((c_out, 1))],
        out_specs=act_spec(c_out),
        out_shape=jax.ShapeDtypeStruct((c_out, cols), jnp.float32),
        compiler_params=params,
    )(pos, z1, x2, w2t, scale1, shift1, scale2, shift2, w3m, b3.reshape(c_out, 1))

    return jnp.transpose(out2.reshape(c_out, n, seq), (1, 0, 2))


# ----------------------------- pure-JAX reference -----------------------------
def _conv1d_ref(x, w, b, pad):
    n, c, L = x.shape
    o, _, k = w.shape
    xp = jnp.pad(x, ((0, 0), (0, 0), (pad, pad)))
    out = jnp.zeros((n, o, L), jnp.float32)
    for kk in range(k):
        out = out + jnp.einsum('ncl,oc->nol', xp[:, :, kk:kk + L], w[:, :, kk])
    return out + b[None, :, None]


def _bn_ref(y, g, b):
    m = y.mean(axis=(0, 2), keepdims=True)
    v = ((y - m) ** 2).mean(axis=(0, 2), keepdims=True)
    return g[None, :, None] * (y - m) / jnp.sqrt(v + BN_EPS) + b[None, :, None]


def residual_ref(x, w1, b1, g1, be1, w2, b2, g2, be2, w3, b3):
    L = x.shape[-1]
    y = jax.nn.relu(_bn_ref(_conv1d_ref(x, w1, b1, 1), g1, be1))
    y = _bn_ref(_conv1d_ref(y, w2, b2, 1), g2, be2)
    xp_neg = jnp.pad(x, ((0, 0), (0, 0), (1, 1)), constant_values=-jnp.inf)
    x_max = jnp.max(jnp.stack([xp_neg[:, :, k:k + L] for k in range(3)], 0), axis=0)
    xp0 = jnp.pad(x, ((0, 0), (0, 0), (1, 1)))
    x_avg = sum(xp0[:, :, k:k + L] for k in range(3)) / 3.0
    x_sc = _conv1d_ref(0.5 * (x_max + x_avg), w3, b3, 0)
    return jax.nn.relu(y + x_sc)


if __name__ == "__main__":
    # small but non-degenerate: 128-lane samples, 2 grid tiles of 2 samples each
    N, C_IN, C_OUT, L = 4, 4, 8, 128

    key = jax.random.PRNGKey(0)
    ks = jax.random.split(key, 12)
    f32 = jnp.float32

    x = jax.random.normal(ks[0], (N, C_IN, L), f32)

    w1 = 0.2 * jax.random.normal(ks[1], (C_OUT, C_IN, 3), f32)
    b1 = 0.1 * jax.random.normal(ks[2], (C_OUT,), f32)
    w2 = 0.2 * jax.random.normal(ks[3], (C_OUT, C_OUT, 3), f32)
    b2 = 0.1 * jax.random.normal(ks[4], (C_OUT,), f32)
    w3 = 0.2 * jax.random.normal(ks[5], (C_OUT, C_IN, 1), f32)
    b3 = 0.1 * jax.random.normal(ks[6], (C_OUT,), f32)
    g1 = 1.0 + 0.1 * jax.random.normal(ks[7], (C_OUT,), f32)
    be1 = 0.1 * jax.random.normal(ks[8], (C_OUT,), f32)
    g2 = 1.0 + 0.1 * jax.random.normal(ks[9], (C_OUT,), f32)
    be2 = 0.1 * jax.random.normal(ks[10], (C_OUT,), f32)

    out = residual_forward(x, w1, b1, g1, be1, w2, b2, g2, be2, w3, b3)
    out = jax.block_until_ready(out)

    ref = residual_ref(x, w1, b1, g1, be1, w2, b2, g2, be2, w3, b3)
    assert out.shape == (N, C_OUT, L)
    err = float(jnp.max(jnp.abs(out - ref)))
    assert jnp.allclose(out, ref, atol=1e-4, rtol=1e-4), f"max abs err = {err}"

    print("KERNEL_OK")
</pallas_src>

<mosaic_0001>
module attributes {stable_mosaic.version = 11 : i64} {
  func.func @kernel(%arg0: i32, %arg1: memref<1x256xi32, #tpu.memory_space<vmem>>, %arg2: memref<4x256xf32, #tpu.memory_space<vmem>>, %arg3: memref<3x8x4xf32, #tpu.memory_space<vmem>>, %arg4: memref<8x256xf32, #tpu.memory_space<vmem>>, %arg5: memref<1x16x1xf32, #tpu.memory_space<vmem>>) attributes {dimension_semantics = [#tpu.dimension_semantics<parallel>], iteration_bounds = array<i64: 2>, scalar_prefetch = 0 : i64, scratch_operands = 0 : i64, tpu.core_type = #tpu.core_type<tc>, window_params = [{pipeline_mode = #tpu.pipeline_mode<synchronous>, transform_indices = @transform_0, window_bounds = array<i64: 1, 256>}, {transform_indices = @transform_1, window_bounds = array<i64: 4, 256>}, {pipeline_mode = #tpu.pipeline_mode<synchronous>, transform_indices = @transform_2, window_bounds = array<i64: 3, 8, 4>}, {transform_indices = @transform_3, window_bounds = array<i64: 8, 256>}, {transform_indices = @transform_4, window_bounds = array<i64: 1, 16, 1>}]} {
    %c0 = arith.constant 0 : index
    %c0_0 = arith.constant 0 : index
    %0 = vector.load %arg1[%c0, %c0_0] : memref<1x256xi32, #tpu.memory_space<vmem>>, vector<1x256xi32>
    %c1_i32 = arith.constant 1 : i32
    %1 = vector.broadcast %c1_i32 : i32 to vector<1x256xi32>
    %2 = arith.cmpi sge, %0, %1 : vector<1x256xi32>
    %c126_i32 = arith.constant 126 : i32
    %3 = vector.broadcast %c126_i32 : i32 to vector<1x256xi32>
    %4 = arith.cmpi sle, %0, %3 : vector<1x256xi32>
    %c0_1 = arith.constant 0 : index
    %c0_2 = arith.constant 0 : index
    %5 = vector.load %arg2[%c0_1, %c0_2] : memref<4x256xf32, #tpu.memory_space<vmem>>, vector<4x256xf32>
    %c1_i32_3 = arith.constant 1 : i32
    %6 = tpu.dynamic_rotate %5 by %c1_i32_3 dim 1 : vector<4x256xf32>, i32 -> vector<4x256xf32>
    %c255_i32 = arith.constant 255 : i32
    %7 = tpu.dynamic_rotate %5 by %c255_i32 dim 1 : vector<4x256xf32>, i32 -> vector<4x256xf32>
    %c1 = arith.constant 1 : index
    %c0_4 = arith.constant 0 : index
    %c0_5 = arith.constant 0 : index
    %8 = vector.load %arg3[%c1, %c0_4, %c0_5] : memref<3x8x4xf32, #tpu.memory_space<vmem>>, vector<1x8x4xf32>
    %9 = vector.shape_cast %8 : vector<1x8x4xf32> to vector<8x4xf32>
    %cst = arith.constant dense<0.000000e+00> : vector<8x256xf32>
    %10 = tpu.matmul %9, %5, %cst {dimension_numbers = #tpu.dot_dimension_numbers<[1], [0], [0], [1], [0, 0, 1, 1], [], []>} : vector<8x4xf32>, vector<4x256xf32>, vector<8x256xf32> -> vector<8x256xf32>
    %c0_6 = arith.constant 0 : index
    %c0_7 = arith.constant 0 : index
    %c0_8 = arith.constant 0 : index
    %11 = vector.load %arg3[%c0_6, %c0_7, %c0_8] : memref<3x8x4xf32, #tpu.memory_space<vmem>>, vector<1x8x4xf32>
    %12 = vector.shape_cast %11 : vector<1x8x4xf32> to vector<8x4xf32>
    %cst_9 = arith.constant 0.000000e+00 : f32
    %13 = vector.shape_cast %2 : vector<1x256xi1> to vector<1x256xi1>
    %14 = vector.broadcast %13 : vector<1x256xi1> to vector<4x256xi1>
    %15 = vector.broadcast %cst_9 : f32 to vector<4x256xf32>
    %16 = arith.select %14, %6, %15 : vector<4x256xi1>, vector<4x256xf32>
    %cst_10 = arith.constant dense<0.000000e+00> : vector<8x256xf32>
    %17 = tpu.matmul %12, %16, %cst_10 {dimension_numbers = #tpu.dot_dimension_numbers<[1], [0], [0], [1], [0, 0, 1, 1], [], []>} : vector<8x4xf32>, vector<4x256xf32>, vector<8x256xf32> -> vector<8x256xf32>
    %18 = arith.addf %10, %17 : vector<8x256xf32>
    %c2 = arith.constant 2 : index
    %c0_11 = arith.constant 0 : index
    %c0_12 = arith.constant 0 : index
    %19 = vector.load %arg3[%c2, %c0_11, %c0_12] : memref<3x8x4xf32, #tpu.memory_space<vmem>>, vector<1x8x4xf32>
    %20 = vector.shape_cast %19 : vector<1x8x4xf32> to vector<8x4xf32>
    %cst_13 = arith.constant 0.000000e+00 : f32
    %21 = vector.shape_cast %4 : vector<1x256xi1> to vector<1x256xi1>
    %22 = vector.broadcast %21 : vector<1x256xi1> to vector<4x256xi1>
    %23 = vector.broadcast %cst_13 : f32 to vector<4x256xf32>
    %24 = arith.select %22, %7, %23 : vector<4x256xi1>, vector<4x256xf32>
    %cst_14 = arith.constant dense<0.000000e+00> : vector<8x256xf32>
    %25 = tpu.matmul %20, %24, %cst_14 {dimension_numbers = #tpu.dot_dimension_numbers<[1], [0], [0], [1], [0, 0, 1, 1], [], []>} : vector<8x4xf32>, vector<4x256xf32>, vector<8x256xf32> -> vector<8x256xf32>
    %26 = arith.addf %18, %25 : vector<8x256xf32>
    %c0_15 = arith.constant 0 : index
    %c0_16 = arith.constant 0 : index
    %27 = vector.load %arg4[%c0_15, %c0_16] : memref<8x256xf32, #tpu.memory_space<vmem>>, vector<8x256xf32>
    tpu.vector_store %arg4[%c0_15, %c0_16], %26 {strides = array<i32>} : memref<8x256xf32, #tpu.memory_space<vmem>>, vector<8x256xf32>,
    %cst_17 = arith.constant dense<0.000000e+00> : vector<8xf32>
    %28 = vector.multi_reduction <add>, %26, %cst_17 [1] : vector<8x256xf32> to vector<8xf32>
    %29 = vector.shape_cast %28 : vector<8xf32> to vector<8x1xf32>
    %c0_18 = arith.constant 0 : index
    %c0_19 = arith.constant 0 : index
    %c0_20 = arith.constant 0 : index
    %30 = vector.load %arg5[%c0_18, %c0_19, %c0_20] : memref<1x16x1xf32, #tpu.memory_space<vmem>>, vector<1x8x1xf32>
    %31 = vector.shape_cast %30 : vector<1x8x1xf32> to vector<8x1xf32>
    %32 = vector.shape_cast %29 : vector<8x1xf32> to vector<1x8x1xf32>
    tpu.vector_store %arg5[%c0_18, %c0_19, %c0_20], %32 {strides = array<i32>} : memref<1x16x1xf32, #tpu.memory_space<vmem>>, vector<1x8x1xf32>,
    %33 = arith.mulf %26, %26 : vector<8x256xf32>
    %cst_21 = arith.constant dense<0.000000e+00> : vector<8xf32>
    %34 = vector.multi_reduction <add>, %33, %cst_21 [1] : vector<8x256xf32> to vector<8xf32>
    %35 = vector.shape_cast %34 : vector<8xf32> to vector<8x1xf32>
    %c0_22 = arith.constant 0 : index
    %c8 = arith.constant 8 : index
    %c0_23 = arith.constant 0 : index
    %36 = vector.load %arg5[%c0_22, %c8, %c0_23] : memref<1x16x1xf32, #tpu.memory_space<vmem>>, vector<1x8x1xf32>
    %37 = vector.shape_cast %36 : vector<1x8x1xf32> to vector<8x1xf32>
    %38 = vector.shape_cast %35 : vector<8x1xf32> to vector<1x8x1xf32>
    tpu.vector_store %arg5[%c0_22, %c8, %c0_23], %38 {strides = array<i32>} : memref<1x16x1xf32, #tpu.memory_space<vmem>>, vector<1x8x1xf32>,
    return
  }
  func.func @transform_0(%arg0: i32) -> (i32, i32) {
    %c0_i32 = arith.constant 0 : i32
    %c0_i32_0 = arith.constant 0 : i32
    %c0_i32_1 = arith.constant 0 : i32
    return %c0_i32, %c0_i32_0 : i32, i32
  }
  func.func @transform_1(%arg0: i32) -> (i32, i32) {
    %c0_i32 = arith.constant 0 : i32
    %c0_i32_0 = arith.constant 0 : i32
    return %c0_i32, %arg0 : i32, i32
  }
  func.func @transform_2(%arg0: i32) -> (i32, i32, i32) {
    %c0_i32 = arith.constant 0 : i32
    %c0_i32_0 = arith.constant 0 : i32
    %c0_i32_1 = arith.constant 0 : i32
    %c0_i32_2 = arith.constant 0 : i32
    return %c0_i32, %c0_i32_0, %c0_i32_1 : i32, i32, i32
  }
  func.func @transform_3(%arg0: i32) -> (i32, i32) {
    %c0_i32 = arith.constant 0 : i32
    %c0_i32_0 = arith.constant 0 : i32
    return %c0_i32, %arg0 : i32, i32
  }
  func.func @transform_4(%arg0: i32) -> (i32, i32, i32) {
    %c0_i32 = arith.constant 0 : i32
    %c0_i32_0 = arith.constant 0 : i32
    %c0_i32_1 = arith.constant 0 : i32
    return %arg0, %c0_i32, %c0_i32_0 : i32, i32, i32
  }
}

module attributes {stable_mosaic.version = 11 : i64} {
  func.func @kernel(%arg0: i32, %arg1: memref<1x256xi32, #tpu.memory_space<vmem>>, %arg2: memref<8x256xf32, #tpu.memory_space<vmem>>, %arg3: memref<3x8x8xf32, #tpu.memory_space<vmem>>, %arg4: memref<8x1xf32, #tpu.memory_space<vmem>>, %arg5: memref<8x1xf32, #tpu.memory_space<vmem>>, %arg6: memref<1x16x1xf32, #tpu.memory_space<vmem>>) attributes {dimension_semantics = [#tpu.dimension_semantics<parallel>], iteration_bounds = array<i64: 2>, scalar_prefetch = 0 : i64, scratch_operands = 0 : i64, tpu.core_type = #tpu.core_type<tc>, window_params = [{pipeline_mode = #tpu.pipeline_mode<synchronous>, transform_indices = @transform_0, window_bounds = array<i64: 1, 256>}, {transform_indices = @transform_1, window_bounds = array<i64: 8, 256>}, {pipeline_mode = #tpu.pipeline_mode<synchronous>, transform_indices = @transform_2, window_bounds = array<i64: 3, 8, 8>}, {pipeline_mode = #tpu.pipeline_mode<synchronous>, transform_indices = @transform_3, window_bounds = array<i64: 8, 1>}, {pipeline_mode = #tpu.pipeline_mode<synchronous>, transform_indices = @transform_4, window_bounds = array<i64: 8, 1>}, {transform_indices = @transform_5, window_bounds = array<i64: 1, 16, 1>}]} {
    %c0 = arith.constant 0 : index
    %c0_0 = arith.constant 0 : index
    %0 = vector.load %arg1[%c0, %c0_0] : memref<1x256xi32, #tpu.memory_space<vmem>>, vector<1x256xi32>
    %c1_i32 = arith.constant 1 : i32
    %1 = vector.broadcast %c1_i32 : i32 to vector<1x256xi32>
    %2 = arith.cmpi sge, %0, %1 : vector<1x256xi32>
    %c126_i32 = arith.constant 126 : i32
    %3 = vector.broadcast %c126_i32 : i32 to vector<1x256xi32>
    %4 = arith.cmpi sle, %0, %3 : vector<1x256xi32>
    %c0_1 = arith.constant 0 : index
    %c0_2 = arith.constant 0 : index
    %5 = vector.load %arg2[%c0_1, %c0_2] : memref<8x256xf32, #tpu.memory_space<vmem>>, vector<8x256xf32>
    %c0_3 = arith.constant 0 : index
    %c0_4 = arith.constant 0 : index
    %6 = vector.load %arg4[%c0_3, %c0_4] : memref<8x1xf32, #tpu.memory_space<vmem>>, vector<8x1xf32>
    %7 = vector.broadcast %6 : vector<8x1xf32> to vector<8x256xf32>
    %8 = arith.mulf %5, %7 : vector<8x256xf32>
    %c0_5 = arith.constant 0 : index
    %c0_6 = arith.constant 0 : index
    %9 = vector.load %arg5[%c0_5, %c0_6] : memref<8x1xf32, #tpu.memory_space<vmem>>, vector<8x1xf32>
    %10 = vector.broadcast %9 : vector<8x1xf32> to vector<8x256xf32>
    %11 = arith.addf %8, %10 : vector<8x256xf32>
    %cst = arith.constant 0.000000e+00 : f32
    %12 = vector.broadcast %cst : f32 to vector<8x256xf32>
    %13 = arith.maximumf %11, %12 : vector<8x256xf32>
    %c1_i32_7 = arith.constant 1 : i32
    %14 = tpu.dynamic_rotate %13 by %c1_i32_7 dim 1 : vector<8x256xf32>, i32 -> vector<8x256xf32>
    %c255_i32 = arith.constant 255 : i32
    %15 = tpu.dynamic_rotate %13 by %c255_i32 dim 1 : vector<8x256xf32>, i32 -> vector<8x256xf32>
    %c1 = arith.constant 1 : index
    %c0_8 = arith.constant 0 : index
    %c0_9 = arith.constant 0 : index
    %16 = vector.load %arg3[%c1, %c0_8, %c0_9] : memref<3x8x8xf32, #tpu.memory_space<vmem>>, vector<1x8x8xf32>
    %17 = vector.shape_cast %16 : vector<1x8x8xf32> to vector<8x8xf32>
    %cst_10 = arith.constant dense<0.000000e+00> : vector<8x256xf32>
    %18 = tpu.matmul %17, %13, %cst_10 {dimension_numbers = #tpu.dot_dimension_numbers<[1], [0], [0], [1], [0, 0, 1, 1], [], []>} : vector<8x8xf32>, vector<8x256xf32>, vector<8x256xf32> -> vector<8x256xf32>
    %c0_11 = arith.constant 0 : index
    %c0_12 = arith.constant 0 : index
    %c0_13 = arith.constant 0 : index
    %19 = vector.load %arg3[%c0_11, %c0_12, %c0_13] : memref<3x8x8xf32, #tpu.memory_space<vmem>>, vector<1x8x8xf32>
    %20 = vector.shape_cast %19 : vector<1x8x8xf32> to vector<8x8xf32>
    %cst_14 = arith.constant 0.000000e+00 : f32
    %21 = vector.shape_cast %2 : vector<1x256xi1> to vector<1x256xi1>
    %22 = vector.broadcast %21 : vector<1x256xi1> to vector<8x256xi1>
    %23 = vector.broadcast %cst_14 : f32 to vector<8x256xf32>
    %24 = arith.select %22, %14, %23 : vector<8x256xi1>, vector<8x256xf32>
    %cst_15 = arith.constant dense<0.000000e+00> : vector<8x256xf32>
    %25 = tpu.matmul %20, %24, %cst_15 {dimension_numbers = #tpu.dot_dimension_numbers<[1], [0], [0], [1], [0, 0, 1, 1], [], []>} : vector<8x8xf32>, vector<8x256xf32>, vector<8x256xf32> -> vector<8x256xf32>
    %26 = arith.addf %18, %25 : vector<8x256xf32>
    %c2 = arith.constant 2 : index
    %c0_16 = arith.constant 0 : index
    %c0_17 = arith.constant 0 : index
    %27 = vector.load %arg3[%c2, %c0_16, %c0_17] : memref<3x8x8xf32, #tpu.memory_space<vmem>>, vector<1x8x8xf32>
    %28 = vector.shape_cast %27 : vector<1x8x8xf32> to vector<8x8xf32>
    %cst_18 = arith.constant 0.000000e+00 : f32
    %29 = vector.shape_cast %4 : vector<1x256xi1> to vector<1x256xi1>
    %30 = vector.broadcast %29 : vector<1x256xi1> to vector<8x256xi1>
    %31 = vector.broadcast %cst_18 : f32 to vector<8x256xf32>
    %32 = arith.select %30, %15, %31 : vector<8x256xi1>, vector<8x256xf32>
    %cst_19 = arith.constant dense<0.000000e+00> : vector<8x256xf32>
    %33 = tpu.matmul %28, %32, %cst_19 {dimension_numbers = #tpu.dot_dimension_numbers<[1], [0], [0], [1], [0, 0, 1, 1], [], []>} : vector<8x8xf32>, vector<8x256xf32>, vector<8x256xf32> -> vector<8x256xf32>
    %34 = arith.addf %26, %33 : vector<8x256xf32>
    %cst_20 = arith.constant dense<0.000000e+00> : vector<8xf32>
    %35 = vector.multi_reduction <add>, %34, %cst_20 [1] : vector<8x256xf32> to vector<8xf32>
    %36 = vector.shape_cast %35 : vector<8xf32> to vector<8x1xf32>
    %c0_21 = arith.constant 0 : index
    %c0_22 = arith.constant 0 : index
    %c0_23 = arith.constant 0 : index
    %37 = vector.load %arg6[%c0_21, %c0_22, %c0_23] : memref<1x16x1xf32, #tpu.memory_space<vmem>>, vector<1x8x1xf32>
    %38 = vector.shape_cast %37 : vector<1x8x1xf32> to vector<8x1xf32>
    %39 = vector.shape_cast %36 : vector<8x1xf32> to vector<1x8x1xf32>
    tpu.vector_store %arg6[%c0_21, %c0_22, %c0_23], %39 {strides = array<i32>} : memref<1x16x1xf32, #tpu.memory_space<vmem>>, vector<1x8x1xf32>,
    %40 = arith.mulf %34, %34 : vector<8x256xf32>
    %cst_24 = arith.constant dense<0.000000e+00> : vector<8xf32>
    %41 = vector.multi_reduction <add>, %40, %cst_24 [1] : vector<8x256xf32> to vector<8xf32>
    %42 = vector.shape_cast %41 : vector<8xf32> to vector<8x1xf32>
    %c0_25 = arith.constant 0 : index
    %c8 = arith.constant 8 : index
    %c0_26 = arith.constant 0 : index
    %43 = vector.load %arg6[%c0_25, %c8, %c0_26] : memref<1x16x1xf32, #tpu.memory_space<vmem>>, vector<1x8x1xf32>
    %44 = vector.shape_cast %43 : vector<1x8x1xf32> to vector<8x1xf32>
    %45 = vector.shape_cast %42 : vector<8x1xf32> to vector<1x8x1xf32>
    tpu.vector_store %arg6[%c0_25, %c8, %c0_26], %45 {strides = array<i32>} : memref<1x16x1xf32, #tpu.memory_space<vmem>>, vector<1x8x1xf32>,
    return
  }
  func.func @transform_0(%arg0: i32) -> (i32, i32) {
    %c0_i32 = arith.constant 0 : i32
    %c0_i32_0 = arith.constant 0 : i32
    %c0_i32_1 = arith.constant 0 : i32
    return %c0_i32, %c0_i32_0 : i32, i32
  }
  func.func @transform_1(%arg0: i32) -> (i32, i32) {
    %c0_i32 = arith.constant 0 : i32
    %c0_i32_0 = arith.constant 0 : i32
    return %c0_i32, %arg0 : i32, i32
  }
  func.func @transform_2(%arg0: i32) -> (i32, i32, i32) {
    %c0_i32 = arith.constant 0 : i32
    %c0_i32_0 = arith.constant 0 : i32
    %c0_i32_1 = arith.constant 0 : i32
    %c0_i32_2 = arith.constant 0 : i32
    return %c0_i32, %c0_i32_0, %c0_i32_1 : i32, i32, i32
  }
  func.func @transform_3(%arg0: i32) -> (i32, i32) {
    %c0_i32 = arith.constant 0 : i32
    %c0_i32_0 = arith.constant 0 : i32
    %c0_i32_1 = arith.constant 0 : i32
    return %c0_i32, %c0_i32_0 : i32, i32
  }
  func.func @transform_4(%arg0: i32) -> (i32, i32) {
    %c0_i32 = arith.constant 0 : i32
    %c0_i32_0 = arith.constant 0 : i32
    %c0_i32_1 = arith.constant 0 : i32
    return %c0_i32, %c0_i32_0 : i32, i32
  }
  func.func @transform_5(%arg0: i32) -> (i32, i32, i32) {
    %c0_i32 = arith.constant 0 : i32
    %c0_i32_0 = arith.constant 0 : i32
    %c0_i32_1 = arith.constant 0 : i32
    return %arg0, %c0_i32, %c0_i32_0 : i32, i32, i32
  }
}

module attributes {stable_mosaic.version = 11 : i64} {
  func.func @kernel(%arg0: i32, %arg1: memref<1x256xi32, #tpu.memory_space<vmem>>, %arg2: memref<8x256xf32, #tpu.memory_space<vmem>>, %arg3: memref<4x256xf32, #tpu.memory_space<vmem>>, %arg4: memref<3x8x8xf32, #tpu.memory_space<vmem>>, %arg5: memref<8x1xf32, #tpu.memory_space<vmem>>, %arg6: memref<8x1xf32, #tpu.memory_space<vmem>>, %arg7: memref<8x1xf32, #tpu.memory_space<vmem>>, %arg8: memref<8x1xf32, #tpu.memory_space<vmem>>, %arg9: memref<8x4xf32, #tpu.memory_space<vmem>>, %arg10: memref<8x1xf32, #tpu.memory_space<vmem>>, %arg11: memref<8x256xf32, #tpu.memory_space<vmem>>) attributes {dimension_semantics = [#tpu.dimension_semantics<parallel>], iteration_bounds = array<i64: 2>, scalar_prefetch = 0 : i64, scratch_operands = 0 : i64, tpu.core_type = #tpu.core_type<tc>, window_params = [{pipeline_mode = #tpu.pipeline_mode<synchronous>, transform_indices = @transform_0, window_bounds = array<i64: 1, 256>}, {transform_indices = @transform_1, window_bounds = array<i64: 8, 256>}, {transform_indices = @transform_2, window_bounds = array<i64: 4, 256>}, {pipeline_mode = #tpu.pipeline_mode<synchronous>, transform_indices = @transform_3, window_bounds = array<i64: 3, 8, 8>}, {pipeline_mode = #tpu.pipeline_mode<synchronous>, transform_indices = @transform_4, window_bounds = array<i64: 8, 1>}, {pipeline_mode = #tpu.pipeline_mode<synchronous>, transform_indices = @transform_5, window_bounds = array<i64: 8, 1>}, {pipeline_mode = #tpu.pipeline_mode<synchronous>, transform_indices = @transform_6, window_bounds = array<i64: 8, 1>}, {pipeline_mode = #tpu.pipeline_mode<synchronous>, transform_indices = @transform_7, window_bounds = array<i64: 8, 1>}, {pipeline_mode = #tpu.pipeline_mode<synchronous>, transform_indices = @transform_8, window_bounds = array<i64: 8, 4>}, {pipeline_mode = #tpu.pipeline_mode<synchronous>, transform_indices = @transform_9, window_bounds = array<i64: 8, 1>}, {transform_indices = @transform_10, window_bounds = array<i64: 8, 256>}]} {
    %c0 = arith.constant 0 : index
    %c0_0 = arith.constant 0 : index
    %0 = vector.load %arg1[%c0, %c0_0] : memref<1x256xi32, #tpu.memory_space<vmem>>, vector<1x256xi32>
    %c1_i32 = arith.constant 1 : i32
    %1 = vector.broadcast %c1_i32 : i32 to vector<1x256xi32>
    %2 = arith.cmpi sge, %0, %1 : vector<1x256xi32>
    %c126_i32 = arith.constant 126 : i32
    %3 = vector.broadcast %c126_i32 : i32 to vector<1x256xi32>
    %4 = arith.cmpi sle, %0, %3 : vector<1x256xi32>
    %c0_1 = arith.constant 0 : index
    %c0_2 = arith.constant 0 : index
    %5 = vector.load %arg2[%c0_1, %c0_2] : memref<8x256xf32, #tpu.memory_space<vmem>>, vector<8x256xf32>
    %c0_3 = arith.constant 0 : index
    %c0_4 = arith.constant 0 : index
    %6 = vector.load %arg5[%c0_3, %c0_4] : memref<8x1xf32, #tpu.memory_space<vmem>>, vector<8x1xf32>
    %7 = vector.broadcast %6 : vector<8x1xf32> to vector<8x256xf32>
    %8 = arith.mulf %5, %7 : vector<8x256xf32>
    %c0_5 = arith.constant 0 : index
    %c0_6 = arith.constant 0 : index
    %9 = vector.load %arg6[%c0_5, %c0_6] : memref<8x1xf32, #tpu.memory_space<vmem>>, vector<8x1xf32>
    %10 = vector.broadcast %9 : vector<8x1xf32> to vector<8x256xf32>
    %11 = arith.addf %8, %10 : vector<8x256xf32>
    %cst = arith.constant 0.000000e+00 : f32
    %12 = vector.broadcast %cst : f32 to vector<8x256xf32>
    %13 = arith.maximumf %11, %12 : vector<8x256xf32>
    %c1_i32_7 = arith.constant 1 : i32
    %14 = tpu.dynamic_rotate %13 by %c1_i32_7 dim 1 : vector<8x256xf32>, i32 -> vector<8x256xf32>
    %c255_i32 = arith.constant 255 : i32
    %15 = tpu.dynamic_rotate %13 by %c255_i32 dim 1 : vector<8x256xf32>, i32 -> vector<8x256xf32>
    %c1 = arith.constant 1 : index
    %c0_8 = arith.constant 0 : index
    %c0_9 = arith.constant 0 : index
    %16 = vector.load %arg4[%c1, %c0_8, %c0_9] : memref<3x8x8xf32, #tpu.memory_space<vmem>>, vector<1x8x8xf32>
    %17 = vector.shape_cast %16 : vector<1x8x8xf32> to vector<8x8xf32>
    %cst_10 = arith.constant dense<0.000000e+00> : vector<8x256xf32>
    %18 = tpu.matmul %17, %13, %cst_10 {dimension_numbers = #tpu.dot_dimension_numbers<[1], [0], [0], [1], [0, 0, 1, 1], [], []>} : vector<8x8xf32>, vector<8x256xf32>, vector<8x256xf32> -> vector<8x256xf32>
    %c0_11 = arith.constant 0 : index
    %c0_12 = arith.constant 0 : index
    %c0_13 = arith.constant 0 : index
    %19 = vector.load %arg4[%c0_11, %c0_12, %c0_13] : memref<3x8x8xf32, #tpu.memory_space<vmem>>, vector<1x8x8xf32>
    %20 = vector.shape_cast %19 : vector<1x8x8xf32> to vector<8x8xf32>
    %cst_14 = arith.constant 0.000000e+00 : f32
    %21 = vector.shape_cast %2 : vector<1x256xi1> to vector<1x256xi1>
    %22 = vector.broadcast %21 : vector<1x256xi1> to vector<8x256xi1>
    %23 = vector.broadcast %cst_14 : f32 to vector<8x256xf32>
    %24 = arith.select %22, %14, %23 : vector<8x256xi1>, vector<8x256xf32>
    %cst_15 = arith.constant dense<0.000000e+00> : vector<8x256xf32>
    %25 = tpu.matmul %20, %24, %cst_15 {dimension_numbers = #tpu.dot_dimension_numbers<[1], [0], [0], [1], [0, 0, 1, 1], [], []>} : vector<8x8xf32>, vector<8x256xf32>, vector<8x256xf32> -> vector<8x256xf32>
    %26 = arith.addf %18, %25 : vector<8x256xf32>
    %c2 = arith.constant 2 : index
    %c0_16 = arith.constant 0 : index
    %c0_17 = arith.constant 0 : index
    %27 = vector.load %arg4[%c2, %c0_16, %c0_17] : memref<3x8x8xf32, #tpu.memory_space<vmem>>, vector<1x8x8xf32>
    %28 = vector.shape_cast %27 : vector<1x8x8xf32> to vector<8x8xf32>
    %cst_18 = arith.constant 0.000000e+00 : f32
    %29 = vector.shape_cast %4 : vector<1x256xi1> to vector<1x256xi1>
    %30 = vector.broadcast %29 : vector<1x256xi1> to vector<8x256xi1>
    %31 = vector.broadcast %cst_18 : f32 to vector<8x256xf32>
    %32 = arith.select %30, %15, %31 : vector<8x256xi1>, vector<8x256xf32>
    %cst_19 = arith.constant dense<0.000000e+00> : vector<8x256xf32>
    %33 = tpu.matmul %28, %32, %cst_19 {dimension_numbers = #tpu.dot_dimension_numbers<[1], [0], [0], [1], [0, 0, 1, 1], [], []>} : vector<8x8xf32>, vector<8x256xf32>, vector<8x256xf32> -> vector<8x256xf32>
    %34 = arith.addf %26, %33 : vector<8x256xf32>
    %c0_20 = arith.constant 0 : index
    %c0_21 = arith.constant 0 : index
    %35 = vector.load %arg7[%c0_20, %c0_21] : memref<8x1xf32, #tpu.memory_space<vmem>>, vector<8x1xf32>
    %36 = vector.broadcast %35 : vector<8x1xf32> to vector<8x256xf32>
    %37 = arith.mulf %34, %36 : vector<8x256xf32>
    %c0_22 = arith.constant 0 : index
    %c0_23 = arith.constant 0 : index
    %38 = vector.load %arg8[%c0_22, %c0_23] : memref<8x1xf32, #tpu.memory_space<vmem>>, vector<8x1xf32>
    %39 = vector.broadcast %38 : vector<8x1xf32> to vector<8x256xf32>
    %40 = arith.addf %37, %39 : vector<8x256xf32>
    %c0_24 = arith.constant 0 : index
    %c0_25 = arith.constant 0 : index
    %41 = vector.load %arg3[%c0_24, %c0_25] : memref<4x256xf32, #tpu.memory_space<vmem>>, vector<4x256xf32>
    %c1_i32_26 = arith.constant 1 : i32
    %42 = tpu.dynamic_rotate %41 by %c1_i32_26 dim 1 : vector<4x256xf32>, i32 -> vector<4x256xf32>
    %c255_i32_27 = arith.constant 255 : i32
    %43 = tpu.dynamic_rotate %41 by %c255_i32_27 dim 1 : vector<4x256xf32>, i32 -> vector<4x256xf32>
    %cst_28 = arith.constant 0xFF800000 : f32
    %44 = vector.shape_cast %2 : vector<1x256xi1> to vector<1x256xi1>
    %45 = vector.broadcast %44 : vector<1x256xi1> to vector<4x256xi1>
    %46 = vector.broadcast %cst_28 : f32 to vector<4x256xf32>
    %47 = arith.select %45, %42, %46 : vector<4x256xi1>, vector<4x256xf32>
    %48 = arith.maximumf %47, %41 : vector<4x256xf32>
    %cst_29 = arith.constant 0xFF800000 : f32
    %49 = vector.shape_cast %4 : vector<1x256xi1> to vector<1x256xi1>
    %50 = vector.broadcast %49 : vector<1x256xi1> to vector<4x256xi1>
    %51 = vector.broadcast %cst_29 : f32 to vector<4x256xf32>
    %52 = arith.select %50, %43, %51 : vector<4x256xi1>, vector<4x256xf32>
    %53 = arith.maximumf %48, %52 : vector<4x256xf32>
    %cst_30 = arith.constant 0.000000e+00 : f32
    %54 = vector.shape_cast %2 : vector<1x256xi1> to vector<1x256xi1>
    %55 = vector.broadcast %54 : vector<1x256xi1> to vector<4x256xi1>
    %56 = vector.broadcast %cst_30 : f32 to vector<4x256xf32>
    %57 = arith.select %55, %42, %56 : vector<4x256xi1>, vector<4x256xf32>
    %58 = arith.addf %57, %41 : vector<4x256xf32>
    %cst_31 = arith.constant 0.000000e+00 : f32
    %59 = vector.shape_cast %4 : vector<1x256xi1> to vector<1x256xi1>
    %60 = vector.broadcast %59 : vector<1x256xi1> to vector<4x256xi1>
    %61 = vector.broadcast %cst_31 : f32 to vector<4x256xf32>
    %62 = arith.select %60, %43, %61 : vector<4x256xi1>, vector<4x256xf32>
    %63 = arith.addf %58, %62 : vector<4x256xf32>
    %cst_32 = arith.constant 0.333333343 : f32
    %64 = vector.broadcast %cst_32 : f32 to vector<4x256xf32>
    %65 = arith.mulf %63, %64 : vector<4x256xf32>
    %66 = arith.addf %53, %65 : vector<4x256xf32>
    %cst_33 = arith.constant 5.000000e-01 : f32
    %67 = vector.broadcast %cst_33 : f32 to vector<4x256xf32>
    %68 = arith.mulf %67, %66 : vector<4x256xf32>
    %c0_34 = arith.constant 0 : index
    %c0_35 = arith.constant 0 : index
    %69 = vector.load %arg9[%c0_34, %c0_35] : memref<8x4xf32, #tpu.memory_space<vmem>>, vector<8x4xf32>
    %cst_36 = arith.constant dense<0.000000e+00> : vector<8x256xf32>
    %70 = tpu.matmul %69, %68, %cst_36 {dimension_numbers = #tpu.dot_dimension_numbers<[1], [0], [0], [1], [0, 0, 1, 1], [], []>} : vector<8x4xf32>, vector<4x256xf32>, vector<8x256xf32> -> vector<8x256xf32>
    %c0_37 = arith.constant 0 : index
    %c0_38 = arith.constant 0 : index
    %71 = vector.load %arg10[%c0_37, %c0_38] : memref<8x1xf32, #tpu.memory_space<vmem>>, vector<8x1xf32>
    %72 = vector.broadcast %71 : vector<8x1xf32> to vector<8x256xf32>
    %73 = arith.addf %70, %72 : vector<8x256xf32>
    %74 = arith.addf %40, %73 : vector<8x256xf32>
    %cst_39 = arith.constant 0.000000e+00 : f32
    %75 = vector.broadcast %cst_39 : f32 to vector<8x256xf32>
    %76 = arith.maximumf %74, %75 : vector<8x256xf32>
    %c0_40 = arith.constant 0 : index
    %c0_41 = arith.constant 0 : index
    %77 = vector.load %arg11[%c0_40, %c0_41] : memref<8x256xf32, #tpu.memory_space<vmem>>, vector<8x256xf32>
    tpu.vector_store %arg11[%c0_40, %c0_41], %76 {strides = array<i32>} : memref<8x256xf32, #tpu.memory_space<vmem>>, vector<8x256xf32>,
    return
  }
  func.func @transform_0(%arg0: i32) -> (i32, i32) {
    %c0_i32 = arith.constant 0 : i32
    %c0_i32_0 = arith.constant 0 : i32
    %c0_i32_1 = arith.constant 0 : i32
    return %c0_i32, %c0_i32_0 : i32, i32
  }
  func.func @transform_1(%arg0: i32) -> (i32, i32) {
    %c0_i32 = arith.constant 0 : i32
    %c0_i32_0 = arith.constant 0 : i32
    return %c0_i32, %arg0 : i32, i32
  }
  func.func @transform_2(%arg0: i32) -> (i32, i32) {
    %c0_i32 = arith.constant 0 : i32
    %c0_i32_0 = arith.constant 0 : i32
    return %c0_i32, %arg0 : i32, i32
  }
  func.func @transform_3(%arg0: i32) -> (i32, i32, i32) {
    %c0_i32 = arith.constant 0 : i32
    %c0_i32_0 = arith.constant 0 : i32
    %c0_i32_1 = arith.constant 0 : i32
    %c0_i32_2 = arith.constant 0 : i32
    return %c0_i32, %c0_i32_0, %c0_i32_1 : i32, i32, i32
  }
  func.func @transform_4(%arg0: i32) -> (i32, i32) {
    %c0_i32 = arith.constant 0 : i32
    %c0_i32_0 = arith.constant 0 : i32
    %c0_i32_1 = arith.constant 0 : i32
    return %c0_i32, %c0_i32_0 : i32, i32
  }
  func.func @transform_5(%arg0: i32) -> (i32, i32) {
    %c0_i32 = arith.constant 0 : i32
    %c0_i32_0 = arith.constant 0 : i32
    %c0_i32_1 = arith.constant 0 : i32
    return %c0_i32, %c0_i32_0 : i32, i32
  }
  func.func @transform_6(%arg0: i32) -> (i32, i32) {
    %c0_i32 = arith.constant 0 : i32
    %c0_i32_0 = arith.constant 0 : i32
    %c0_i32_1 = arith.constant 0 : i32
    return %c0_i32, %c0_i32_0 : i32, i32
  }
  func.func @transform_7(%arg0: i32) -> (i32, i32) {
    %c0_i32 = arith.constant 0 : i32
    %c0_i32_0 = arith.constant 0 : i32
    %c0_i32_1 = arith.constant 0 : i32
    return %c0_i32, %c0_i32_0 : i32, i32
  }
  func.func @transform_8(%arg0: i32) -> (i32, i32) {
    %c0_i32 = arith.constant 0 : i32
    %c0_i32_0 = arith.constant 0 : i32
    %c0_i32_1 = arith.constant 0 : i32
    return %c0_i32, %c0_i32_0 : i32, i32
  }
  func.func @transform_9(%arg0: i32) -> (i32, i32) {
    %c0_i32 = arith.constant 0 : i32
    %c0_i32_0 = arith.constant 0 : i32
    %c0_i32_1 = arith.constant 0 : i32
    return %c0_i32, %c0_i32_0 : i32, i32
  }
  func.func @transform_10(%arg0: i32) -> (i32, i32) {
    %c0_i32 = arith.constant 0 : i32
    %c0_i32_0 = arith.constant 0 : i32
    return %c0_i32, %arg0 : i32, i32
  }
}

</mosaic_0001>

<llo_original>
// kernel: residual_forward.4
$region0: #{residual_forward.4}
  #allocation0 [shape = 'u32[]', space=smem, size = 0x4, offset = 0x4, fixed_abs, tag = 'smem constant byte address 0x4 - core index']
  #allocation1 [shape = 'u32[144,128]{1,0:T(1,128)}', space=vmem, size = 0x12000, scoped, tag = 'internal scratch']
  %s0 = inlined_call_operand.vmem [shape: s32[1,256], index: 0, kind: input, shape index: {}]
  %s1 = inlined_call_operand.vmem [shape: f32[8,512], index: 1, kind: input, shape index: {}]
  %s2 = inlined_call_operand.vmem [shape: f32[3,8,8], index: 2, kind: input, shape index: {}]
  %s3 = inlined_call_operand.vmem [shape: f32[8,1], index: 3, kind: input, shape index: {}]
  %s4 = inlined_call_operand.vmem [shape: f32[8,1], index: 4, kind: input, shape index: {}]
  %s5 = inlined_call_operand.vmem [shape: f32[2,16,1], index: 5, kind: output, shape index: {}]
  %s6 = sld [smem:[#allocation0]]
  $region53: #{residual_forward.4} parent=0
    _
  %s8 = ssub.s32 1, %s6
  %s9 = scalar_select 0, %s8, %s6
  loop: start=0, step=1, limit=4
  $region2: #{residual_forward.4} parent=0 // loop_pre_header
    _
  $region3: #{residual_forward.4} parent=0 // loop_header
    %s11 = sphi 0, %s15
    %p12 = scmp.ge.s32.totalorder %s11, 4
    %s19 = sphi 0, %s19
    %s21 = sphi 0, %s19
    %s22 = sphi 0, %s21
    %s36 = sphi 0, %s22
    %s42 = sphi 0, %s44
    %s45 = sphi 0, %s42
    %s46 = sphi 0, %s45
    %s62 = sphi 0, %s46
    %s66 = sphi 0, %s66
    %s68 = sphi 0, %s66
    %s69 = sphi 0, %s68
    %s83 = sphi 0, %s69
    %s87 = sphi 0, %s87
    %s89 = sphi 0, %s87
    %s90 = sphi 0, %s89
    %s104 = sphi 0, %s90
    %s108 = sphi 0, %s108
    %s110 = sphi 0, %s108
    %s111 = sphi 0, %s110
    %s125 = sphi 0, %s111
    %s131 = sphi 0, %s133
    %s134 = sphi 0, %s131
    %s135 = sphi 0, %s134
    %s151 = sphi 0, %s135
  $region4: #{residual_forward.4} parent=0 // loop_header_branch
    %14 = sbr.rel (%p12) target = $region8
  $region5: #{residual_forward.4} parent=0 // loop_body
    %s16 = ssub.s32 %s11, 1
    %s17 = ssub.s32 %s11, 2
    %s18 = sadd.s32 %s11, 1
    %s20 = sadd.s32 %s19, 1
    %p23 = scmp.eq.s32.totalorder %s11, 1
    %p24 = scmp.ne.s32.totalorder %s19, %s21
    %p25 = scmp.eq.s32.totalorder %s11, 0
    %p26 = por %p24, %p25
    %p27 = scmp.ne.s32.totalorder %s19, %s21
    %p28 = scmp.eq.s32.totalorder %s16, 1
    %p29 = por %p27, %p28
    %p30 = scmp.ne.s32.totalorder %s21, %s22
    %p31 = scmp.eq.s32.totalorder %s16, 0
    %p32 = por %p30, %p31
    %p33 = scmp.ne.s32.totalorder %s21, %s22
    %p34 = scmp.eq.s32.totalorder %s17, 1
    %p35 = por %p33, %p34
    %p37 = scmp.ne.s32.totalorder %s22, %s36
    %p38 = scmp.eq.s32.totalorder %s17, 0
    %p39 = por %p37, %p38
    %s40 = ssub.s32 %s11, %s18
    %p41 = scmp.eq.s32.totalorder %s40, 0
    %s43 = sadd.s32 %s42, 1
    %s44 = scalar_select %p41, %s42, %s43
    %p47 = pneg %p41
    %p48 = scmp.eq.s32.totalorder %s11, 1
    %p49 = por %p47, %p48
    %p50 = scmp.ne.s32.totalorder %s42, %s45
    %p51 = scmp.eq.s32.totalorder %s11, 0
    %p52 = por %p50, %p51
    %p53 = scmp.ne.s32.totalorder %s42, %s45
    %p54 = scmp.eq.s32.totalorder %s16, 1
    %p55 = por %p53, %p54
    %p56 = scmp.ne.s32.totalorder %s45, %s46
    %p57 = scmp.eq.s32.totalorder %s16, 0
    %p58 = por %p56, %p57
    %p59 = scmp.ne.s32.totalorder %s45, %s46
    %p60 = scmp.eq.s32.totalorder %s17, 1
    %p61 = por %p59, %p60
    %p63 = scmp.ne.s32.totalorder %s46, %s62
    %p64 = scmp.eq.s32.totalorder %s17, 0
    %p65 = por %p63, %p64
    %s67 = sadd.s32 %s66, 1
    %p70 = scmp.eq.s32.totalorder %s11, 1
    %p71 = scmp.ne.s32.totalorder %s66, %s68
    %p72 = scmp.eq.s32.totalorder %s11, 0
    %p73 = por %p71, %p72
    %p74 = scmp.ne.s32.totalorder %s66, %s68
    %p75 = scmp.eq.s32.totalorder %s16, 1
    %p76 = por %p74, %p75
    %p77 = scmp.ne.s32.totalorder %s68, %s69
    %p78 = scmp.eq.s32.totalorder %s16, 0
    %p79 = por %p77, %p78
    %p80 = scmp.ne.s32.totalorder %s68, %s69
    %p81 = scmp.eq.s32.totalorder %s17, 1
    %p82 = por %p80, %p81
    %p84 = scmp.ne.s32.totalorder %s69, %s83
    %p85 = scmp.eq.s32.totalorder %s17, 0
    %p86 = por %p84, %p85
    %s88 = sadd.s32 %s87, 1
    %p91 = scmp.eq.s32.totalorder %s11, 1
    %p92 = scmp.ne.s32.totalorder %s87, %s89
    %p93 = scmp.eq.s32.totalorder %s11, 0
    %p94 = por %p92, %p93
    %p95 = scmp.ne.s32.totalorder %s87, %s89
    %p96 = scmp.eq.s32.totalorder %s16, 1
    %p97 = por %p95, %p96
    %p98 = scmp.ne.s32.totalorder %s89, %s90
    %p99 = scmp.eq.s32.totalorder %s16, 0
    %p100 = por %p98, %p99
    %p101 = scmp.ne.s32.totalorder %s89, %s90
    %p102 = scmp.eq.s32.totalorder %s17, 1
    %p103 = por %p101, %p102
    %p105 = scmp.ne.s32.totalorder %s90, %s104
    %p106 = scmp.eq.s32.totalorder %s17, 0
    %p107 = por %p105, %p106
    %s109 = sadd.s32 %s108, 1
    %p112 = scmp.eq.s32.totalorder %s11, 1
    %p113 = scmp.ne.s32.totalorder %s108, %s110
    %p114 = scmp.eq.s32.totalorder %s11, 0
    %p115 = por %p113, %p114
    %p116 = scmp.ne.s32.totalorder %s108, %s110
    %p117 = scmp.eq.s32.totalorder %s16, 1
    %p118 = por %p116, %p117
    %p119 = scmp.ne.s32.totalorder %s110, %s111
    %p120 = scmp.eq.s32.totalorder %s16, 0
    %p121 = por %p119, %p120
    %p122 = scmp.ne.s32.totalorder %s110, %s111
    %p123 = scmp.eq.s32.totalorder %s17, 1
    %p124 = por %p122, %p123
    %p126 = scmp.ne.s32.totalorder %s111, %s125
    %p127 = scmp.eq.s32.totalorder %s17, 0
    %p128 = por %p126, %p127
    %s129 = ssub.s32 %s11, %s18
    %p130 = scmp.eq.s32.totalorder %s129, 0
    %s132 = sadd.s32 %s131, 1
    %s133 = scalar_select %p130, %s131, %s132
    %p136 = pneg %p130
    %p137 = scmp.eq.s32.totalorder %s11, 1
    %p138 = por %p136, %p137
    %p139 = scmp.ne.s32.totalorder %s131, %s134
    %p140 = scmp.eq.s32.totalorder %s11, 0
    %p141 = por %p139, %p140
    %p142 = scmp.ne.s32.totalorder %s131, %s134
    %p143 = scmp.eq.s32.totalorder %s16, 1
    %p144 = por %p142, %p143
    %p145 = scmp.ne.s32.totalorder %s134, %s135
    %p146 = scmp.eq.s32.totalorder %s16, 0
    %p147 = por %p145, %p146
    %p148 = scmp.ne.s32.totalorder %s134, %s135
    %p149 = scmp.eq.s32.totalorder %s17, 1
    %p150 = por %p148, %p149
    %p152 = scmp.ne.s32.totalorder %s135, %s151
    %p153 = scmp.eq.s32.totalorder %s17, 0
    %p154 = por %p152, %p153
    %p155 = scmp.le.s32.totalorder 1, %s11
    %p156 = scmp.lt.s32.totalorder %s11, 3
    %p157 = pnand %p155, %p156
    %p158 = pneg %p157
    // Predicated region
    $region9: #{residual_forward.4} parent=5 // pred_check
      _
    $region10: #{residual_forward.4} parent=5 // pred_check_branch
      %160 = sbr.rel (%p157) target = $region12
    $region11: #{residual_forward.4} parent=5 // pred_region
      %s161 = ssub.s32 %s11, 1
      // Predicated region
      $region13: #{residual_forward.4} parent=11 // pred_check
        %p162 = pneg %p32
      $region14: #{residual_forward.4} parent=11 // pred_check_branch
        %164 = sbr.rel (%p162) target = $region16
      $region15: #{residual_forward.4} parent=11 // pred_region
        _
      $region16: #{residual_forward.4} parent=11 // pred_fallthru
        _
      // Predicated region
      $region17: #{residual_forward.4} parent=11 // pred_check
        %p165 = pneg %p79
      $region18: #{residual_forward.4} parent=11 // pred_check_branch
        %167 = sbr.rel (%p165) target = $region20
      $region19: #{residual_forward.4} parent=11 // pred_region
        _
      $region20: #{residual_forward.4} parent=11 // pred_fallthru
        _
      // Predicated region
      $region21: #{residual_forward.4} parent=11 // pred_check
        %p168 = pneg %p100
      $region22: #{residual_forward.4} parent=11 // pred_check_branch
        %170 = sbr.rel (%p168) target = $region24
      $region23: #{residual_forward.4} parent=11 // pred_region
        _
      $region24: #{residual_forward.4} parent=11 // pred_fallthru
        _
      // Predicated region
      $region25: #{residual_forward.4} parent=11 // pred_check
        %p171 = pneg %p121
      $region26: #{residual_forward.4} parent=11 // pred_check_branch
        %173 = sbr.rel (%p171) target = $region28
      $region27: #{residual_forward.4} parent=11 // pred_region
        _
      $region28: #{residual_forward.4} parent=11 // pred_fallthru
        _
    $region12: #{residual_forward.4} parent=5 // pred_fallthru
      _
    %p174 = scmp.lt.s32.totalorder %s11, 2
    // Predicated region
    $region29: #{residual_forward.4} parent=5 // pred_check
      %p175 = pneg %p174
    $region30: #{residual_forward.4} parent=5 // pred_check_branch
      %177 = sbr.rel (%p175) target = $region32
    $region31: #{residual_forward.4} parent=5 // pred_region
      // Predicated region
      $region33: #{residual_forward.4} parent=31 // pred_check
        %p178 = pneg %p52
      $region34: #{residual_forward.4} parent=31 // pred_check_branch
        %180 = sbr.rel (%p178) target = $region36
      $region35: #{residual_forward.4} parent=31 // pred_region
        %s181 = smul.u32 2, %s11
        %p182 = scmp.lt.s32.totalorder %s181, 3
        %s183 = scalar_select %p182, %s181, 3
        %s184 = smul.addr %s183, 8
        %s185 = scalar_lea.vmem %s1, %s184
        %s186 = smul.u32 2, %s11
      $region36: #{residual_forward.4} parent=31 // pred_fallthru
        _
    $region32: #{residual_forward.4} parent=5 // pred_fallthru
      _
    %p187 = scmp.le.s32.totalorder 1, %s11
    %p188 = scmp.lt.s32.totalorder %s11, 3
    %p189 = pnand %p187, %p188
    %p190 = pneg %p189
    // Predicated region
    $region37: #{residual_forward.4} parent=5 // pred_check
      _
    $region38: #{residual_forward.4} parent=5 // pred_check_branch
      %192 = sbr.rel (%p189) target = $region40
    $region39: #{residual_forward.4} parent=5 // pred_region
      %s193 = ssub.s32 %s11, 1
      %p194 = pneg %p32
      %p195 = pneg %p29
      %s196 = smul.u32 2, %s16
      %p197 = scmp.lt.s32.totalorder %s196, 3
      %s198 = scalar_select %p197, %s196, 3
      %s199 = smul.addr %s198, 8
      %s200 = scalar_lea.vmem %s1, %s199
      %p201 = pneg %p58
      %p202 = pneg %p55
      %p203 = pneg %p79
      %p204 = pneg %p76
      %p205 = pneg %p100
      %p206 = pneg %p97
      %p207 = pneg %p121
      %p208 = pneg %p118
      %p209 = pneg %p147
      %p210 = pneg %p144
      %p211 = scmp.lt.s32.totalorder %s16, 1
      %s212 = scalar_select %p211, %s16, 1
      %s213 = smul.addr %s212, 2
      %s214 = smul.addr %s213, 8
      %s215 = scalar_lea.vmem %s5, %s214
      %s216 = smul.u32 2, %s16
      %p217 = scmp.lt.s32.totalorder %s216, 3
      %s218 = scalar_select %p217, %s216, 3
      %s219 = smul.addr %s218, 8
      %s220 = scalar_lea.vmem %s1, %s219
      %s221 = smul.u32 2, %s16
      %p222 = scmp.lt.s32.totalorder %s16, 1
      %s223 = scalar_select %p222, %s16, 1
      %s224 = smul.addr %s223, 2
      %s225 = smul.addr %s224, 8
      %s226 = scalar_lea.vmem %s5, %s225
      %v227 = vld [vmem:[%s0] sm:$0x3]
      %vm228 = vcmp.ge.s32.totalorder %v227, 1
      %vm229 = vcmp.le.s32.totalorder %v227, 126
      %v230 = vld [vmem:[%s220] sm:$0xff]
      %v231 = vld [vmem:[%s220 + $0x8] sm:$0xff]
      %v232 = vld [vmem:[%s3] sm:$0xff]
      %234 = vset.pattern.permute.xlu0 0
      %235 = vperm.xlu0 %234, %v232
      %v236 = vpop.permute.xlu0 %235
      %v238 = vmul.f32 %v230, %v236
      %v239 = vmul.f32 %v231, %v236
      %v240 = vld [vmem:[%s4] sm:$0xff]
      %242 = vset.pattern.permute.xlu0 0
      %243 = vperm.xlu0 %242, %v240
      %v244 = vpop.permute.xlu0 %243
      %v246 = vadd.f32 %v238, %v244
      %v247 = vadd.f32 %v239, %v244
      %v248 = vmax.f32 %v246, 0.0
      %v249 = vmax.f32 %v247, 0.0
      %250 = vrot.lane.b32.xlu0 %v248, 1
      %v251 = vpop.permute.xlu0 %250
      %252 = vrot.lane.b32.xlu0 %v249, 1
      %v253 = vpop.permute.xlu0 %252
      %v254 = vlaneseq
      %v255 = vand.u32 %v254, 127
      %vm256 = vcmp.lt.s32.totalorder %v255, 1
      %v257 = vsel %vm256, %v251, %v253
      %v258 = vsel %vm256, %v253, %v251
      %259 = vrot.lane.b32.xlu0 %v248, 127
      %v260 = vpop.permute.xlu0 %259
      %261 = vrot.lane.b32.xlu0 %v249, 127
      %v262 = vpop.permute.xlu0 %261
      %vm263 = vcmp.lt.s32.totalorder %v255, 127
      %v264 = vsel %vm263, %v260, %v262
      %v265 = vsel %vm263, %v262, %v260
      %s266 = scalar_lea.vmem %s2, 8
      %v267 = vld [vmem:[%s266] sm:$0xff]
      %v268 = vld [vmem:[%s2] sm:$0xff]
      %v269 = vsel %vm228, 1, 0
      %v270 = vlaneseq
      %v271 = vshrl.u32 %v270, 7
      %v272 = vsub.s32 0, %v271
      %v273 = vrot.slane %v269, %v272
      %v274 = vlaneseq
      %v275 = vshrl.u32 %v274, 7
      %v276 = vsub.s32 1, %v275
      %v277 = vrot.slane %v269, %v276
      %vm278 = vcmp.eq.s32.totalorder %v273, 1
      %vm279 = vcmp.eq.s32.totalorder %v277, 1
      %v280 = vsel %vm278, %v258, 0.0
      %v281 = vsel %vm279, %v257, 0.0
      %vm282 = vcmask 64512
      %v284 = vsel %vm282, %v268, 0
      %286 = vmatprep.subr.mxu0 %v281
      %287 = vmatpush1.msra.mxu0 %v280
      %288 = vmatprep.subr.mxu0 0.0
      %289 = vmatpush1.msra.mxu0 0.0
      %290 = vmatprep.subr.mxu0 0.0
      %291 = vmatpush1.msra.mxu0 0.0
      %292 = vmatprep.subr.mxu0 0.0
      %293 = vmatpush1.msra.mxu0 0.0
      %294 = vmatprep.subr.mxu0 0.0
      %295 = vmatpush1.msra.mxu0 0.0
      %296 = vmatprep.subr.mxu0 0.0
      %297 = vmatpush1.msra.mxu0 0.0
      %298 = vmatprep.subr.mxu0 0.0
      %299 = vmatpush1.msra.mxu0 0.0
      %300 = vmatprep.subr.mxu0 0.0
      %301 = vmatpush1.msra.mxu0 0.0
      %302 = vmatprep.subr.mxu0 0.0
      %303 = vmatpush1.msra.mxu0 0.0
      %304 = vmatprep.subr.mxu0 0.0
      %305 = vmatpush1.msra.mxu0 0.0
      %306 = vmatprep.subr.mxu0 0.0
      %307 = vmatpush1.msra.mxu0 0.0
      %308 = vmatprep.subr.mxu0 0.0
      %309 = vmatpush1.msra.mxu0 0.0
      %310 = vmatprep.subr.mxu0 0.0
      %311 = vmatpush1.msra.mxu0 0.0
      %312 = vmatprep.subr.mxu0 0.0
      %313 = vmatpush1.msra.mxu0 0.0
      %314 = vmatprep.subr.mxu0 0.0
      %315 = vmatpush1.msra.mxu0 0.0
      %316 = vmatprep.subr.mxu0 0.0
      %317 = vmatpush1.msra.mxu0 0.0
      %318 = vmatprep.subr.mxu0 0.0
      %319 = vmatpush1.msra.mxu0 0.0
      %320 = vmatprep.subr.mxu0 0.0
      %321 = vmatpush1.msra.mxu0 0.0
      %322 = vmatprep.subr.mxu0 0.0
      %323 = vmatpush1.msra.mxu0 0.0
      %324 = vmatprep.subr.mxu0 0.0
      %325 = vmatpush1.msra.mxu0 0.0
      %326 = vmatprep.subr.mxu0 0.0
      %327 = vmatpush1.msra.mxu0 0.0
      %328 = vmatprep.subr.mxu0 0.0
      %329 = vmatpush1.msra.mxu0 0.0
      %330 = vmatprep.subr.mxu0 0.0
      %331 = vmatpush1.msra.mxu0 0.0
      %332 = vmatprep.subr.mxu0 0.0
      %333 = vmatpush1.msra.mxu0 0.0
      %334 = vmatprep.subr.mxu0 0.0
      %335 = vmatpush1.msra.mxu0 0.0
      %336 = vmatprep.subr.mxu0 0.0
      %337 = vmatpush1.msra.mxu0 0.0
      %338 = vmatprep.subr.mxu0 0.0
      %339 = vmatpush1.msra.mxu0 0.0
      %340 = vmatprep.subr.mxu0 0.0
      %341 = vmatpush1.msra.mxu0 0.0
      %342 = vmatprep.subr.mxu0 0.0
      %343 = vmatpush1.msra.mxu0 0.0
      %344 = vmatprep.subr.mxu0 0.0
      %345 = vmatpush1.msra.mxu0 0.0
      %346 = vmatprep.subr.mxu0 0.0
      %347 = vmatpush1.msra.mxu0 0.0
      %348 = vmatprep.subr.mxu0 0.0
      %349 = vmatpush1.msra.mxu0 0.0
      %350 = vmatprep.mubr.f32.mxu0 0.0
      %351 = vmatmul.mubr.f32.gmra.mrb[0].mxu0 %v284
      %v352 = vpop.f32.mrb[0].mxu0
      %v353 = vadd.f32 0.0, %v352
      %v354 = vpop.f32.mrb[0].mxu0
      %v355 = vadd.f32 0.0, %v354
      %356 = vdwg.mxu0
      %v358 = vsel %vm282, %v267, 0
      %360 = vmatprep.subr.mxu0 %v249
      %361 = vmatpush1.msra.mxu0 %v248
      %362 = vmatprep.subr.mxu0 0.0
      %363 = vmatpush1.msra.mxu0 0.0
      %364 = vmatprep.subr.mxu0 0.0
      %365 = vmatpush1.msra.mxu0 0.0
      %366 = vmatprep.subr.mxu0 0.0
      %367 = vmatpush1.msra.mxu0 0.0
      %368 = vmatprep.subr.mxu0 0.0
      %369 = vmatpush1.msra.mxu0 0.0
      %370 = vmatprep.subr.mxu0 0.0
      %371 = vmatpush1.msra.mxu0 0.0
      %372 = vmatprep.subr.mxu0 0.0
      %373 = vmatpush1.msra.mxu0 0.0
      %374 = vmatprep.subr.mxu0 0.0
      %375 = vmatpush1.msra.mxu0 0.0
      %376 = vmatprep.subr.mxu0 0.0
      %377 = vmatpush1.msra.mxu0 0.0
      %378 = vmatprep.subr.mxu0 0.0
      %379 = vmatpush1.msra.mxu0 0.0
      %380 = vmatprep.subr.mxu0 0.0
      %381 = vmatpush1.msra.mxu0 0.0
      %382 = vmatprep.subr.mxu0 0.0
      %383 = vmatpush1.msra.mxu0 0.0
      %384 = vmatprep.subr.mxu0 0.0
      %385 = vmatpush1.msra.mxu0 0.0
      %386 = vmatprep.subr.mxu0 0.0
      %387 = vmatpush1.msra.mxu0 0.0
      %388 = vmatprep.subr.mxu0 0.0
      %389 = vmatpush1.msra.mxu0 0.0
      %390 = vmatprep.subr.mxu0 0.0
      %391 = vmatpush1.msra.mxu0 0.0
      %392 = vmatprep.subr.mxu0 0.0
      %393 = vmatpush1.msra.mxu0 0.0
      %394 = vmatprep.subr.mxu0 0.0
      %395 = vmatpush1.msra.mxu0 0.0
      %396 = vmatprep.subr.mxu0 0.0
      %397 = vmatpush1.msra.mxu0 0.0
      %398 = vmatprep.subr.mxu0 0.0
      %399 = vmatpush1.msra.mxu0 0.0
      %400 = vmatprep.subr.mxu0 0.0
      %401 = vmatpush1.msra.mxu0 0.0
      %402 = vmatprep.subr.mxu0 0.0
      %403 = vmatpush1.msra.mxu0 0.0
      %404 = vmatprep.subr.mxu0 0.0
      %405 = vmatpush1.msra.mxu0 0.0
      %406 = vmatprep.subr.mxu0 0.0
      %407 = vmatpush1.msra.mxu0 0.0
      %408 = vmatprep.subr.mxu0 0.0
      %409 = vmatpush1.msra.mxu0 0.0
      %410 = vmatprep.subr.mxu0 0.0
      %411 = vmatpush1.msra.mxu0 0.0
      %412 = vmatprep.subr.mxu0 0.0
      %413 = vmatpush1.msra.mxu0 0.0
      %414 = vmatprep.subr.mxu0 0.0
      %415 = vmatpush1.msra.mxu0 0.0
      %416 = vmatprep.subr.mxu0 0.0
      %417 = vmatpush1.msra.mxu0 0.0
      %418 = vmatprep.subr.mxu0 0.0
      %419 = vmatpush1.msra.mxu0 0.0
      %420 = vmatprep.subr.mxu0 0.0
      %421 = vmatpush1.msra.mxu0 0.0
      %422 = vmatprep.subr.mxu0 0.0
      %423 = vmatpush1.msra.mxu0 0.0
      %424 = vmatprep.mubr.f32.mxu0 0.0
      %425 = vmatmul.mubr.f32.gmra.mrb[0].mxu0 %v358
      %v426 = vpop.f32.mrb[0].mxu0
      %v427 = vadd.f32 %v353, %v426
      %v428 = vpop.f32.mrb[0].mxu0
      %v429 = vadd.f32 %v355, %v428
      %430 = vdwg.mxu0
      %s431 = scalar_lea.vmem %s2, 16
      %v432 = vld [vmem:[%s431] sm:$0xff]
      %v433 = vsel %vm229, 1, 0
      %v434 = vlaneseq
      %v435 = vshrl.u32 %v434, 7
      %v436 = vsub.s32 0, %v435
      %v437 = vrot.slane %v433, %v436
      %v438 = vlaneseq
      %v439 = vshrl.u32 %v438, 7
      %v440 = vsub.s32 1, %v439
      %v441 = vrot.slane %v433, %v440
      %vm442 = vcmp.eq.s32.totalorder %v437, 1
      %vm443 = vcmp.eq.s32.totalorder %v441, 1
      %v444 = vsel %vm442, %v264, 0.0
      %v445 = vsel %vm443, %v265, 0.0
      %v447 = vsel %vm282, %v432, 0
      %449 = vmatprep.subr.mxu0 %v445
      %450 = vmatpush1.msra.mxu0 %v444
      %451 = vmatprep.subr.mxu0 0.0
      %452 = vmatpush1.msra.mxu0 0.0
      %453 = vmatprep.subr.mxu0 0.0
      %454 = vmatpush1.msra.mxu0 0.0
      %455 = vmatprep.subr.mxu0 0.0
      %456 = vmatpush1.msra.mxu0 0.0
      %457 = vmatprep.subr.mxu0 0.0
      %458 = vmatpush1.msra.mxu0 0.0
      %459 = vmatprep.subr.mxu0 0.0
      %460 = vmatpush1.msra.mxu0 0.0
      %461 = vmatprep.subr.mxu0 0.0
      %462 = vmatpush1.msra.mxu0 0.0
      %463 = vmatprep.subr.mxu0 0.0
      %464 = vmatpush1.msra.mxu0 0.0
      %465 = vmatprep.subr.mxu0 0.0
      %466 = vmatpush1.msra.mxu0 0.0
      %467 = vmatprep.subr.mxu0 0.0
      %468 = vmatpush1.msra.mxu0 0.0
      %469 = vmatprep.subr.mxu0 0.0
      %470 = vmatpush1.msra.mxu0 0.0
      %471 = vmatprep.subr.mxu0 0.0
      %472 = vmatpush1.msra.mxu0 0.0
      %473 = vmatprep.subr.mxu0 0.0
      %474 = vmatpush1.msra.mxu0 0.0
      %475 = vmatprep.subr.mxu0 0.0
      %476 = vmatpush1.msra.mxu0 0.0
      %477 = vmatprep.subr.mxu0 0.0
      %478 = vmatpush1.msra.mxu0 0.0
      %479 = vmatprep.subr.mxu0 0.0
      %480 = vmatpush1.msra.mxu0 0.0
      %481 = vmatprep.subr.mxu0 0.0
      %482 = vmatpush1.msra.mxu0 0.0
      %483 = vmatprep.subr.mxu0 0.0
      %484 = vmatpush1.msra.mxu0 0.0
      %485 = vmatprep.subr.mxu0 0.0
      %486 = vmatpush1.msra.mxu0 0.0
      %487 = vmatprep.subr.mxu0 0.0
      %488 = vmatpush1.msra.mxu0 0.0
      %489 = vmatprep.subr.mxu0 0.0
      %490 = vmatpush1.msra.mxu0 0.0
      %491 = vmatprep.subr.mxu0 0.0
      %492 = vmatpush1.msra.mxu0 0.0
      %493 = vmatprep.subr.mxu0 0.0
      %494 = vmatpush1.msra.mxu0 0.0
      %495 = vmatprep.subr.mxu0 0.0
      %496 = vmatpush1.msra.mxu0 0.0
      %497 = vmatprep.subr.mxu0 0.0
      %498 = vmatpush1.msra.mxu0 0.0
      %499 = vmatprep.subr.mxu0 0.0
      %500 = vmatpush1.msra.mxu0 0.0
      %501 = vmatprep.subr.mxu0 0.0
      %502 = vmatpush1.msra.mxu0 0.0
      %503 = vmatprep.subr.mxu0 0.0
      %504 = vmatpush1.msra.mxu0 0.0
      %505 = vmatprep.subr.mxu0 0.0
      %506 = vmatpush1.msra.mxu0 0.0
      %507 = vmatprep.subr.mxu0 0.0
      %508 = vmatpush1.msra.mxu0 0.0
      %509 = vmatprep.subr.mxu0 0.0
      %510 = vmatpush1.msra.mxu0 0.0
      %511 = vmatprep.subr.mxu0 0.0
      %512 = vmatpush1.msra.mxu0 0.0
      %513 = vmatprep.mubr.f32.mxu0 0.0
      %514 = vmatmul.mubr.f32.gmra.mrb[0].mxu0 %v447
      %v515 = vpop.f32.mrb[0].mxu0
      %v516 = vadd.f32 0.0, %v515
      %v517 = vpop.f32.mrb[0].mxu0
      %v518 = vadd.f32 0.0, %v517
      %519 = vdwg.mxu0
      %v520 = vadd.f32 %v427, %v516
      %v521 = vadd.f32 %v429, %v518
      %v522 = vadd.f32 %v520, %v521
      %523 = vadd.xlane.f32.xlu0 %v522
      %v524 = vpop.xlane.xlu0 %523
      %vm525 = vcmask 7168
      %526 = vst.msk [vmem:[%s226] sm:$0xff] %vm525, %v524
      %v527 = vmul.f32 %v520, %v520
      %v528 = vmul.f32 %v521, %v521
      %v529 = vadd.f32 %v527, %v528
      %530 = vadd.xlane.f32.xlu0 %v529
      %v531 = vpop.xlane.xlu0 %530
      %532 = vst.msk [vmem:[%s226 + $0x8] sm:$0xff] %vm525, %v531
      %p533 = scmp.lt.s32.totalorder %s16, 1
      %s534 = scalar_select %p533, %s16, 1
      %s535 = smul.addr %s534, 2
      %s536 = smul.addr %s535, 8
      %s537 = scalar_lea.vmem %s5, %s536
      // Predicated region
      $region41: #{residual_forward.4} parent=39 // pred_check
        %p538 = pneg %p144
      $region42: #{residual_forward.4} parent=39 // pred_check_branch
        %540 = sbr.rel (%p538) target = $region44
      $region43: #{residual_forward.4} parent=39 // pred_region
        _
      $region44: #{residual_forward.4} parent=39 // pred_fallthru
        _
    $region40: #{residual_forward.4} parent=5 // pred_fallthru
      _
    %p541 = scmp.le.s32.totalorder 2, %s11
    // Predicated region
    $region45: #{residual_forward.4} parent=5 // pred_check
      %p542 = pneg %p541
    $region46: #{residual_forward.4} parent=5 // pred_check_branch
      %544 = sbr.rel (%p542) target = $region48
    $region47: #{residual_forward.4} parent=5 // pred_region
      %s545 = ssub.s32 %s11, 2
      // Predicated region
      $region49: #{residual_forward.4} parent=47 // pred_check
        %p546 = pneg %p150
      $region50: #{residual_forward.4} parent=47 // pred_check_branch
        %548 = sbr.rel (%p546) target = $region52
      $region51: #{residual_forward.4} parent=47 // pred_region
        %p549 = scmp.lt.s32.totalorder %s17, 1
        %s550 = scalar_select %p549, %s17, 1
        %s551 = smul.addr %s550, 2
        %s552 = smul.addr %s551, 8
        %s553 = scalar_lea.vmem %s5, %s552
      $region52: #{residual_forward.4} parent=47 // pred_fallthru
        _
    $region48: #{residual_forward.4} parent=5 // pred_fallthru
      _
  $region6: #{residual_forward.4} parent=0 // loop_footer
    %s15 = sadd.s32 1, %s11
  $region7: #{residual_forward.4} parent=0 // loop_footer_branch
    %10 = sbr.rel target = $region3
  $region8: #{residual_forward.4} parent=0 // loop_exit
    _

// kernel: residual_forward.3
$region0: #{residual_forward.3}
  #allocation0 [shape = 'u32[]', space=smem, size = 0x4, offset = 0x4, fixed_abs, tag = 'smem constant byte address 0x4 - core index']
  #allocation1 [shape = 'u32[144,128]{1,0:T(1,128)}', space=vmem, size = 0x12000, scoped, tag = 'internal scratch']
  %s0 = inlined_call_operand.vmem [shape: s32[1,256], index: 0, kind: input, shape index: {}]
  %s1 = inlined_call_operand.vmem [shape: f32[4,512], index: 1, kind: input, shape index: {}]
  %s2 = inlined_call_operand.vmem [shape: f32[3,8,4], index: 2, kind: input, shape index: {}]
  %s3 = inlined_call_operand.vmem [shape: f32[8,512], index: 3, kind: output, shape index: {0}]
  %s4 = inlined_call_operand.vmem [shape: f32[2,16,1], index: 4, kind: output, shape index: {1}]
  %5 = xla_tuple %s3, %s4
  %s6 = sld [smem:[#allocation0]]
  $region53: #{residual_forward.3} parent=0
    _
  %s8 = ssub.s32 1, %s6
  %s9 = scalar_select 0, %s8, %s6
  loop: start=0, step=1, limit=4
  $region2: #{residual_forward.3} parent=0 // loop_pre_header
    _
  $region3: #{residual_forward.3} parent=0 // loop_header
    %s11 = sphi 0, %s15
    %p12 = scmp.ge.s32.totalorder %s11, 4
    %s19 = sphi 0, %s19
    %s21 = sphi 0, %s19
    %s22 = sphi 0, %s21
    %s36 = sphi 0, %s22
    %s42 = sphi 0, %s44
    %s45 = sphi 0, %s42
    %s46 = sphi 0, %s45
    %s62 = sphi 0, %s46
    %s66 = sphi 0, %s66
    %s68 = sphi 0, %s66
    %s69 = sphi 0, %s68
    %s83 = sphi 0, %s69
    %s89 = sphi 0, %s91
    %s92 = sphi 0, %s89
    %s93 = sphi 0, %s92
    %s109 = sphi 0, %s93
    %s115 = sphi 0, %s117
    %s118 = sphi 0, %s115
    %s119 = sphi 0, %s118
    %s135 = sphi 0, %s119
  $region4: #{residual_forward.3} parent=0 // loop_header_branch
    %14 = sbr.rel (%p12) target = $region8
  $region5: #{residual_forward.3} parent=0 // loop_body
    %s16 = ssub.s32 %s11, 1
    %s17 = ssub.s32 %s11, 2
    %s18 = sadd.s32 %s11, 1
    %s20 = sadd.s32 %s19, 1
    %p23 = scmp.eq.s32.totalorder %s11, 1
    %p24 = scmp.ne.s32.totalorder %s19, %s21
    %p25 = scmp.eq.s32.totalorder %s11, 0
    %p26 = por %p24, %p25
    %p27 = scmp.ne.s32.totalorder %s19, %s21
    %p28 = scmp.eq.s32.totalorder %s16, 1
    %p29 = por %p27, %p28
    %p30 = scmp.ne.s32.totalorder %s21, %s22
    %p31 = scmp.eq.s32.totalorder %s16, 0
    %p32 = por %p30, %p31
    %p33 = scmp.ne.s32.totalorder %s21, %s22
    %p34 = scmp.eq.s32.totalorder %s17, 1
    %p35 = por %p33, %p34
    %p37 = scmp.ne.s32.totalorder %s22, %s36
    %p38 = scmp.eq.s32.totalorder %s17, 0
    %p39 = por %p37, %p38
    %s40 = ssub.s32 %s11, %s18
    %p41 = scmp.eq.s32.totalorder %s40, 0
    %s43 = sadd.s32 %s42, 1
    %s44 = scalar_select %p41, %s42, %s43
    %p47 = pneg %p41
    %p48 = scmp.eq.s32.totalorder %s11, 1
    %p49 = por %p47, %p48
    %p50 = scmp.ne.s32.totalorder %s42, %s45
    %p51 = scmp.eq.s32.totalorder %s11, 0
    %p52 = por %p50, %p51
    %p53 = scmp.ne.s32.totalorder %s42, %s45
    %p54 = scmp.eq.s32.totalorder %s16, 1
    %p55 = por %p53, %p54
    %p56 = scmp.ne.s32.totalorder %s45, %s46
    %p57 = scmp.eq.s32.totalorder %s16, 0
    %p58 = por %p56, %p57
    %p59 = scmp.ne.s32.totalorder %s45, %s46
    %p60 = scmp.eq.s32.totalorder %s17, 1
    %p61 = por %p59, %p60
    %p63 = scmp.ne.s32.totalorder %s46, %s62
    %p64 = scmp.eq.s32.totalorder %s17, 0
    %p65 = por %p63, %p64
    %s67 = sadd.s32 %s66, 1
    %p70 = scmp.eq.s32.totalorder %s11, 1
    %p71 = scmp.ne.s32.totalorder %s66, %s68
    %p72 = scmp.eq.s32.totalorder %s11, 0
    %p73 = por %p71, %p72
    %p74 = scmp.ne.s32.totalorder %s66, %s68
    %p75 = scmp.eq.s32.totalorder %s16, 1
    %p76 = por %p74, %p75
    %p77 = scmp.ne.s32.totalorder %s68, %s69
    %p78 = scmp.eq.s32.totalorder %s16, 0
    %p79 = por %p77, %p78
    %p80 = scmp.ne.s32.totalorder %s68, %s69
    %p81 = scmp.eq.s32.totalorder %s17, 1
    %p82 = por %p80, %p81
    %p84 = scmp.ne.s32.totalorder %s69, %s83
    %p85 = scmp.eq.s32.totalorder %s17, 0
    %p86 = por %p84, %p85
    %s87 = ssub.s32 %s11, %s18
    %p88 = scmp.eq.s32.totalorder %s87, 0
    %s90 = sadd.s32 %s89, 1
    %s91 = scalar_select %p88, %s89, %s90
    %p94 = pneg %p88
    %p95 = scmp.eq.s32.totalorder %s11, 1
    %p96 = por %p94, %p95
    %p97 = scmp.ne.s32.totalorder %s89, %s92
    %p98 = scmp.eq.s32.totalorder %s11, 0
    %p99 = por %p97, %p98
    %p100 = scmp.ne.s32.totalorder %s89, %s92
    %p101 = scmp.eq.s32.totalorder %s16, 1
    %p102 = por %p100, %p101
    %p103 = scmp.ne.s32.totalorder %s92, %s93
    %p104 = scmp.eq.s32.totalorder %s16, 0
    %p105 = por %p103, %p104
    %p106 = scmp.ne.s32.totalorder %s92, %s93
    %p107 = scmp.eq.s32.totalorder %s17, 1
    %p108 = por %p106, %p107
    %p110 = scmp.ne.s32.totalorder %s93, %s109
    %p111 = scmp.eq.s32.totalorder %s17, 0
    %p112 = por %p110, %p111
    %s113 = ssub.s32 %s11, %s18
    %p114 = scmp.eq.s32.totalorder %s113, 0
    %s116 = sadd.s32 %s115, 1
    %s117 = scalar_select %p114, %s115, %s116
    %p120 = pneg %p114
    %p121 = scmp.eq.s32.totalorder %s11, 1
    %p122 = por %p120, %p121
    %p123 = scmp.ne.s32.totalorder %s115, %s118
    %p124 = scmp.eq.s32.totalorder %s11, 0
    %p125 = por %p123, %p124
    %p126 = scmp.ne.s32.totalorder %s115, %s118
    %p127 = scmp.eq.s32.totalorder %s16, 1
    %p128 = por %p126, %p127
    %p129 = scmp.ne.s32.totalorder %s118, %s119
    %p130 = scmp.eq.s32.totalorder %s16, 0
    %p131 = por %p129, %p130
    %p132 = scmp.ne.s32.totalorder %s118, %s119
    %p133 = scmp.eq.s32.totalorder %s17, 1
    %p134 = por %p132, %p133
    %p136 = scmp.ne.s32.totalorder %s119, %s135
    %p137 = scmp.eq.s32.totalorder %s17, 0
    %p138 = por %p136, %p137
    %p139 = scmp.le.s32.totalorder 1, %s11
    %p140 = scmp.lt.s32.totalorder %s11, 3
    %p141 = pnand %p139, %p140
    %p142 = pneg %p141
    // Predicated region
    $region9: #{residual_forward.3} parent=5 // pred_check
      _
    $region10: #{residual_forward.3} parent=5 // pred_check_branch
      %144 = sbr.rel (%p141) target = $region12
    $region11: #{residual_forward.3} parent=5 // pred_region
      %s145 = ssub.s32 %s11, 1
      // Predicated region
      $region13: #{residual_forward.3} parent=11 // pred_check
        %p146 = pneg %p32
      $region14: #{residual_forward.3} parent=11 // pred_check_branch
        %148 = sbr.rel (%p146) target = $region16
      $region15: #{residual_forward.3} parent=11 // pred_region
        _
      $region16: #{residual_forward.3} parent=11 // pred_fallthru
        _
      // Predicated region
      $region17: #{residual_forward.3} parent=11 // pred_check
        %p149 = pneg %p79
      $region18: #{residual_forward.3} parent=11 // pred_check_branch
        %151 = sbr.rel (%p149) target = $region20
      $region19: #{residual_forward.3} parent=11 // pred_region
        _
      $region20: #{residual_forward.3} parent=11 // pred_fallthru
        _
    $region12: #{residual_forward.3} parent=5 // pred_fallthru
      _
    %p152 = scmp.lt.s32.totalorder %s11, 2
    // Predicated region
    $region21: #{residual_forward.3} parent=5 // pred_check
      %p153 = pneg %p152
    $region22: #{residual_forward.3} parent=5 // pred_check_branch
      %155 = sbr.rel (%p153) target = $region24
    $region23: #{residual_forward.3} parent=5 // pred_region
      // Predicated region
      $region25: #{residual_forward.3} parent=23 // pred_check
        %p156 = pneg %p52
      $region26: #{residual_forward.3} parent=23 // pred_check_branch
        %158 = sbr.rel (%p156) target = $region28
      $region27: #{residual_forward.3} parent=23 // pred_region
        %s159 = smul.u32 2, %s11
        %p160 = scmp.lt.s32.totalorder %s159, 3
        %s161 = scalar_select %p160, %s159, 3
        %s162 = smul.addr %s161, 4
        %s163 = scalar_lea.vmem %s1, %s162
        %s164 = smul.u32 2, %s11
      $region28: #{residual_forward.3} parent=23 // pred_fallthru
        _
    $region24: #{residual_forward.3} parent=5 // pred_fallthru
      _
    %p165 = scmp.le.s32.totalorder 1, %s11
    %p166 = scmp.lt.s32.totalorder %s11, 3
    %p167 = pnand %p165, %p166
    %p168 = pneg %p167
    // Predicated region
    $region29: #{residual_forward.3} parent=5 // pred_check
      _
    $region30: #{residual_forward.3} parent=5 // pred_check_branch
      %170 = sbr.rel (%p167) target = $region32
    $region31: #{residual_forward.3} parent=5 // pred_region
      %s171 = ssub.s32 %s11, 1
      %p172 = pneg %p32
      %p173 = pneg %p29
      %s174 = smul.u32 2, %s16
      %p175 = scmp.lt.s32.totalorder %s174, 3
      %s176 = scalar_select %p175, %s174, 3
      %s177 = smul.addr %s176, 4
      %s178 = scalar_lea.vmem %s1, %s177
      %p179 = pneg %p58
      %p180 = pneg %p55
      %p181 = pneg %p79
      %p182 = pneg %p76
      %p183 = pneg %p105
      %p184 = pneg %p102
      %s185 = smul.u32 2, %s16
      %p186 = scmp.lt.s32.totalorder %s185, 3
      %s187 = scalar_select %p186, %s185, 3
      %s188 = smul.addr %s187, 8
      %s189 = scalar_lea.vmem %s3, %s188
      %p190 = pneg %p131
      %p191 = pneg %p128
      %p192 = scmp.lt.s32.totalorder %s16, 1
      %s193 = scalar_select %p192, %s16, 1
      %s194 = smul.addr %s193, 2
      %s195 = smul.addr %s194, 8
      %s196 = scalar_lea.vmem %s4, %s195
      %s197 = smul.u32 2, %s16
      %p198 = scmp.lt.s32.totalorder %s197, 3
      %s199 = scalar_select %p198, %s197, 3
      %s200 = smul.addr %s199, 4
      %s201 = scalar_lea.vmem %s1, %s200
      %s202 = smul.u32 2, %s16
      %s203 = smul.u32 2, %s16
      %p204 = scmp.lt.s32.totalorder %s203, 3
      %s205 = scalar_select %p204, %s203, 3
      %s206 = smul.addr %s205, 8
      %s207 = scalar_lea.vmem %s3, %s206
      %s208 = smul.u32 2, %s16
      %p209 = scmp.lt.s32.totalorder %s16, 1
      %s210 = scalar_select %p209, %s16, 1
      %s211 = smul.addr %s210, 2
      %s212 = smul.addr %s211, 8
      %s213 = scalar_lea.vmem %s4, %s212
      %v214 = vld [vmem:[%s0] sm:$0x3]
      %vm215 = vcmp.ge.s32.totalorder %v214, 1
      %vm216 = vcmp.le.s32.totalorder %v214, 126
      %v217 = vld [vmem:[%s201] sm:$0xff]
      %v219 = vcombine.high %v217, %v217
      %221 = vrot.lane.b32.xlu0 %v217, 1
      %v222 = vpop.permute.xlu0 %221
      %223 = vrot.lane.b32.xlu0 %v219, 1
      %v224 = vpop.permute.xlu0 %223
      %v225 = vlaneseq
      %v226 = vand.u32 %v225, 127
      %vm227 = vcmp.lt.s32.totalorder %v226, 1
      %v228 = vsel %vm227, %v222, %v224
      %v229 = vsel %vm227, %v224, %v222
      %230 = vrot.lane.b32.xlu0 %v217, 127
      %v231 = vpop.permute.xlu0 %230
      %232 = vrot.lane.b32.xlu0 %v219, 127
      %v233 = vpop.permute.xlu0 %232
      %vm234 = vcmp.lt.s32.totalorder %v226, 127
      %v235 = vsel %vm234, %v231, %v233
      %v236 = vsel %vm234, %v233, %v231
      %s237 = scalar_lea.vmem %s2, 8
      %v238 = vld [vmem:[%s237] sm:$0xff]
      %v239 = vld [vmem:[%s2] sm:$0xff]
      %v240 = vsel %vm215, 1, 0
      %v241 = vlaneseq
      %v242 = vshrl.u32 %v241, 7
      %v243 = vsub.s32 0, %v242
      %v244 = vrot.slane %v240, %v243
      %v245 = vlaneseq
      %v246 = vshrl.u32 %v245, 7
      %v247 = vsub.s32 1, %v246
      %v248 = vrot.slane %v240, %v247
      %vm249 = vcmp.eq.s32.totalorder %v244, 1
      %vm250 = vcmp.eq.s32.totalorder %v248, 1
      %v251 = vsel %vm249, %v229, 0.0
      %v252 = vsel %vm250, %v228, 0.0
      %vm253 = vcmask 31744
      %v255 = vsel %vm253, %v239, 0
      %vm257 = vcmask 1043456
      %v259 = vsel %vm257, %v251, 0
      %v262 = vsel %vm257, %v252, 0
      %264 = vmatprep.subr.mxu0 %v262
      %265 = vmatpush1.msra.mxu0 %v259
      %266 = vmatprep.subr.mxu0 0.0
      %267 = vmatpush1.msra.mxu0 0.0
      %268 = vmatprep.subr.mxu0 0.0
      %269 = vmatpush1.msra.mxu0 0.0
      %270 = vmatprep.subr.mxu0 0.0
      %271 = vmatpush1.msra.mxu0 0.0
      %272 = vmatprep.subr.mxu0 0.0
      %273 = vmatpush1.msra.mxu0 0.0
      %274 = vmatprep.subr.mxu0 0.0
      %275 = vmatpush1.msra.mxu0 0.0
      %276 = vmatprep.subr.mxu0 0.0
      %277 = vmatpush1.msra.mxu0 0.0
      %278 = vmatprep.subr.mxu0 0.0
      %279 = vmatpush1.msra.mxu0 0.0
      %280 = vmatprep.subr.mxu0 0.0
      %281 = vmatpush1.msra.mxu0 0.0
      %282 = vmatprep.subr.mxu0 0.0
      %283 = vmatpush1.msra.mxu0 0.0
      %284 = vmatprep.subr.mxu0 0.0
      %285 = vmatpush1.msra.mxu0 0.0
      %286 = vmatprep.subr.mxu0 0.0
      %287 = vmatpush1.msra.mxu0 0.0
      %288 = vmatprep.subr.mxu0 0.0
      %289 = vmatpush1.msra.mxu0 0.0
      %290 = vmatprep.subr.mxu0 0.0
      %291 = vmatpush1.msra.mxu0 0.0
      %292 = vmatprep.subr.mxu0 0.0
      %293 = vmatpush1.msra.mxu0 0.0
      %294 = vmatprep.subr.mxu0 0.0
      %295 = vmatpush1.msra.mxu0 0.0
      %296 = vmatprep.subr.mxu0 0.0
      %297 = vmatpush1.msra.mxu0 0.0
      %298 = vmatprep.subr.mxu0 0.0
      %299 = vmatpush1.msra.mxu0 0.0
      %300 = vmatprep.subr.mxu0 0.0
      %301 = vmatpush1.msra.mxu0 0.0
      %302 = vmatprep.subr.mxu0 0.0
      %303 = vmatpush1.msra.mxu0 0.0
      %304 = vmatprep.subr.mxu0 0.0
      %305 = vmatpush1.msra.mxu0 0.0
      %306 = vmatprep.subr.mxu0 0.0
      %307 = vmatpush1.msra.mxu0 0.0
      %308 = vmatprep.subr.mxu0 0.0
      %309 = vmatpush1.msra.mxu0 0.0
      %310 = vmatprep.subr.mxu0 0.0
      %311 = vmatpush1.msra.mxu0 0.0
      %312 = vmatprep.subr.mxu0 0.0
      %313 = vmatpush1.msra.mxu0 0.0
      %314 = vmatprep.subr.mxu0 0.0
      %315 = vmatpush1.msra.mxu0 0.0
      %316 = vmatprep.subr.mxu0 0.0
      %317 = vmatpush1.msra.mxu0 0.0
      %318 = vmatprep.subr.mxu0 0.0
      %319 = vmatpush1.msra.mxu0 0.0
      %320 = vmatprep.subr.mxu0 0.0
      %321 = vmatpush1.msra.mxu0 0.0
      %322 = vmatprep.subr.mxu0 0.0
      %323 = vmatpush1.msra.mxu0 0.0
      %324 = vmatprep.subr.mxu0 0.0
      %325 = vmatpush1.msra.mxu0 0.0
      %326 = vmatprep.subr.mxu0 0.0
      %327 = vmatpush1.msra.mxu0 0.0
      %328 = vmatprep.mubr.f32.mxu0 0.0
      %329 = vmatmul.mubr.f32.gmra.mrb[0].mxu0 %v255
      %v330 = vpop.f32.mrb[0].mxu0
      %v331 = vadd.f32 0.0, %v330
      %v332 = vpop.f32.mrb[0].mxu0
      %v333 = vadd.f32 0.0, %v332
      %334 = vdwg.mxu0
      %v336 = vsel %vm253, %v238, 0
      %v338 = vsel %vm257, %v217, 0
      %v340 = vsel %vm257, %v219, 0
      %342 = vmatprep.subr.mxu0 %v340
      %343 = vmatpush1.msra.mxu0 %v338
      %344 = vmatprep.subr.mxu0 0.0
      %345 = vmatpush1.msra.mxu0 0.0
      %346 = vmatprep.subr.mxu0 0.0
      %347 = vmatpush1.msra.mxu0 0.0
      %348 = vmatprep.subr.mxu0 0.0
      %349 = vmatpush1.msra.mxu0 0.0
      %350 = vmatprep.subr.mxu0 0.0
      %351 = vmatpush1.msra.mxu0 0.0
      %352 = vmatprep.subr.mxu0 0.0
      %353 = vmatpush1.msra.mxu0 0.0
      %354 = vmatprep.subr.mxu0 0.0
      %355 = vmatpush1.msra.mxu0 0.0
      %356 = vmatprep.subr.mxu0 0.0
      %357 = vmatpush1.msra.mxu0 0.0
      %358 = vmatprep.subr.mxu0 0.0
      %359 = vmatpush1.msra.mxu0 0.0
      %360 = vmatprep.subr.mxu0 0.0
      %361 = vmatpush1.msra.mxu0 0.0
      %362 = vmatprep.subr.mxu0 0.0
      %363 = vmatpush1.msra.mxu0 0.0
      %364 = vmatprep.subr.mxu0 0.0
      %365 = vmatpush1.msra.mxu0 0.0
      %366 = vmatprep.subr.mxu0 0.0
      %367 = vmatpush1.msra.mxu0 0.0
      %368 = vmatprep.subr.mxu0 0.0
      %369 = vmatpush1.msra.mxu0 0.0
      %370 = vmatprep.subr.mxu0 0.0
      %371 = vmatpush1.msra.mxu0 0.0
      %372 = vmatprep.subr.mxu0 0.0
      %373 = vmatpush1.msra.mxu0 0.0
      %374 = vmatprep.subr.mxu0 0.0
      %375 = vmatpush1.msra.mxu0 0.0
      %376 = vmatprep.subr.mxu0 0.0
      %377 = vmatpush1.msra.mxu0 0.0
      %378 = vmatprep.subr.mxu0 0.0
      %379 = vmatpush1.msra.mxu0 0.0
      %380 = vmatprep.subr.mxu0 0.0
      %381 = vmatpush1.msra.mxu0 0.0
      %382 = vmatprep.subr.mxu0 0.0
      %383 = vmatpush1.msra.mxu0 0.0
      %384 = vmatprep.subr.mxu0 0.0
      %385 = vmatpush1.msra.mxu0 0.0
      %386 = vmatprep.subr.mxu0 0.0
      %387 = vmatpush1.msra.mxu0 0.0
      %388 = vmatprep.subr.mxu0 0.0
      %389 = vmatpush1.msra.mxu0 0.0
      %390 = vmatprep.subr.mxu0 0.0
      %391 = vmatpush1.msra.mxu0 0.0
      %392 = vmatprep.subr.mxu0 0.0
      %393 = vmatpush1.msra.mxu0 0.0
      %394 = vmatprep.subr.mxu0 0.0
      %395 = vmatpush1.msra.mxu0 0.0
      %396 = vmatprep.subr.mxu0 0.0
      %397 = vmatpush1.msra.mxu0 0.0
      %398 = vmatprep.subr.mxu0 0.0
      %399 = vmatpush1.msra.mxu0 0.0
      %400 = vmatprep.subr.mxu0 0.0
      %401 = vmatpush1.msra.mxu0 0.0
      %402 = vmatprep.subr.mxu0 0.0
      %403 = vmatpush1.msra.mxu0 0.0
      %404 = vmatprep.subr.mxu0 0.0
      %405 = vmatpush1.msra.mxu0 0.0
      %406 = vmatprep.mubr.f32.mxu0 0.0
      %407 = vmatmul.mubr.f32.gmra.mrb[0].mxu0 %v336
      %v408 = vpop.f32.mrb[0].mxu0
      %v409 = vadd.f32 %v331, %v408
      %v410 = vpop.f32.mrb[0].mxu0
      %v411 = vadd.f32 %v333, %v410
      %412 = vdwg.mxu0
      %s413 = scalar_lea.vmem %s2, 16
      %v414 = vld [vmem:[%s413] sm:$0xff]
      %v415 = vsel %vm216, 1, 0
      %v416 = vlaneseq
      %v417 = vshrl.u32 %v416, 7
      %v418 = vsub.s32 0, %v417
      %v419 = vrot.slane %v415, %v418
      %v420 = vlaneseq
      %v421 = vshrl.u32 %v420, 7
      %v422 = vsub.s32 1, %v421
      %v423 = vrot.slane %v415, %v422
      %vm424 = vcmp.eq.s32.totalorder %v419, 1
      %vm425 = vcmp.eq.s32.totalorder %v423, 1
      %v426 = vsel %vm424, %v235, 0.0
      %v427 = vsel %vm425, %v236, 0.0
      %v429 = vsel %vm253, %v414, 0
      %v432 = vsel %vm257, %v426, 0
      %v435 = vsel %vm257, %v427, 0
      %437 = vmatprep.subr.mxu0 %v435
      %438 = vmatpush1.msra.mxu0 %v432
      %439 = vmatprep.subr.mxu0 0.0
      %440 = vmatpush1.msra.mxu0 0.0
      %441 = vmatprep.subr.mxu0 0.0
      %442 = vmatpush1.msra.mxu0 0.0
      %443 = vmatprep.subr.mxu0 0.0
      %444 = vmatpush1.msra.mxu0 0.0
      %445 = vmatprep.subr.mxu0 0.0
      %446 = vmatpush1.msra.mxu0 0.0
      %447 = vmatprep.subr.mxu0 0.0
      %448 = vmatpush1.msra.mxu0 0.0
      %449 = vmatprep.subr.mxu0 0.0
      %450 = vmatpush1.msra.mxu0 0.0
      %451 = vmatprep.subr.mxu0 0.0
      %452 = vmatpush1.msra.mxu0 0.0
      %453 = vmatprep.subr.mxu0 0.0
      %454 = vmatpush1.msra.mxu0 0.0
      %455 = vmatprep.subr.mxu0 0.0
      %456 = vmatpush1.msra.mxu0 0.0
      %457 = vmatprep.subr.mxu0 0.0
      %458 = vmatpush1.msra.mxu0 0.0
      %459 = vmatprep.subr.mxu0 0.0
      %460 = vmatpush1.msra.mxu0 0.0
      %461 = vmatprep.subr.mxu0 0.0
      %462 = vmatpush1.msra.mxu0 0.0
      %463 = vmatprep.subr.mxu0 0.0
      %464 = vmatpush1.msra.mxu0 0.0
      %465 = vmatprep.subr.mxu0 0.0
      %466 = vmatpush1.msra.mxu0 0.0
      %467 = vmatprep.subr.mxu0 0.0
      %468 = vmatpush1.msra.mxu0 0.0
      %469 = vmatprep.subr.mxu0 0.0
      %470 = vmatpush1.msra.mxu0 0.0
      %471 = vmatprep.subr.mxu0 0.0
      %472 = vmatpush1.msra.mxu0 0.0
      %473 = vmatprep.subr.mxu0 0.0
      %474 = vmatpush1.msra.mxu0 0.0
      %475 = vmatprep.subr.mxu0 0.0
      %476 = vmatpush1.msra.mxu0 0.0
      %477 = vmatprep.subr.mxu0 0.0
      %478 = vmatpush1.msra.mxu0 0.0
      %479 = vmatprep.subr.mxu0 0.0
      %480 = vmatpush1.msra.mxu0 0.0
      %481 = vmatprep.subr.mxu0 0.0
      %482 = vmatpush1.msra.mxu0 0.0
      %483 = vmatprep.subr.mxu0 0.0
      %484 = vmatpush1.msra.mxu0 0.0
      %485 = vmatprep.subr.mxu0 0.0
      %486 = vmatpush1.msra.mxu0 0.0
      %487 = vmatprep.subr.mxu0 0.0
      %488 = vmatpush1.msra.mxu0 0.0
      %489 = vmatprep.subr.mxu0 0.0
      %490 = vmatpush1.msra.mxu0 0.0
      %491 = vmatprep.subr.mxu0 0.0
      %492 = vmatpush1.msra.mxu0 0.0
      %493 = vmatprep.subr.mxu0 0.0
      %494 = vmatpush1.msra.mxu0 0.0
      %495 = vmatprep.subr.mxu0 0.0
      %496 = vmatpush1.msra.mxu0 0.0
      %497 = vmatprep.subr.mxu0 0.0
      %498 = vmatpush1.msra.mxu0 0.0
      %499 = vmatprep.subr.mxu0 0.0
      %500 = vmatpush1.msra.mxu0 0.0
      %501 = vmatprep.mubr.f32.mxu0 0.0
      %502 = vmatmul.mubr.f32.gmra.mrb[0].mxu0 %v429
      %v503 = vpop.f32.mrb[0].mxu0
      %v504 = vadd.f32 0.0, %v503
      %v505 = vpop.f32.mrb[0].mxu0
      %v506 = vadd.f32 0.0, %v505
      %507 = vdwg.mxu0
      %v508 = vadd.f32 %v409, %v504
      %v509 = vadd.f32 %v411, %v506
      %510 = vst [vmem:[%s207] sm:$0xff] %v508
      %511 = vst [vmem:[%s207 + $0x8] sm:$0xff] %v509
      %v512 = vadd.f32 %v508, %v509
      %513 = vadd.xlane.f32.xlu0 %v512
      %v514 = vpop.xlane.xlu0 %513
      %vm515 = vcmask 7168
      %516 = vst.msk [vmem:[%s213] sm:$0xff] %vm515, %v514
      %v517 = vmul.f32 %v508, %v508
      %v518 = vmul.f32 %v509, %v509
      %v519 = vadd.f32 %v517, %v518
      %520 = vadd.xlane.f32.xlu0 %v519
      %v521 = vpop.xlane.xlu0 %520
      %522 = vst.msk [vmem:[%s213 + $0x8] sm:$0xff] %vm515, %v521
      %s523 = smul.u32 2, %s16
      %p524 = scmp.lt.s32.totalorder %s523, 3
      %s525 = scalar_select %p524, %s523, 3
      %s526 = smul.addr %s525, 8
      %s527 = scalar_lea.vmem %s3, %s526
      %p528 = scmp.lt.s32.totalorder %s16, 1
      %s529 = scalar_select %p528, %s16, 1
      %s530 = smul.addr %s529, 2
      %s531 = smul.addr %s530, 8
      %s532 = scalar_lea.vmem %s4, %s531
      // Predicated region
      $region33: #{residual_forward.3} parent=31 // pred_check
        %p533 = pneg %p102
      $region34: #{residual_forward.3} parent=31 // pred_check_branch
        %535 = sbr.rel (%p533) target = $region36
      $region35: #{residual_forward.3} parent=31 // pred_region
        %s536 = smul.u32 2, %s16
      $region36: #{residual_forward.3} parent=31 // pred_fallthru
        _
      // Predicated region
      $region37: #{residual_forward.3} parent=31 // pred_check
        %p537 = pneg %p128
      $region38: #{residual_forward.3} parent=31 // pred_check_branch
        %539 = sbr.rel (%p537) target = $region40
      $region39: #{residual_forward.3} parent=31 // pred_region
        _
      $region40: #{residual_forward.3} parent=31 // pred_fallthru
        _
    $region32: #{residual_forward.3} parent=5 // pred_fallthru
      _
    %p540 = scmp.le.s32.totalorder 2, %s11
    // Predicated region
    $region41: #{residual_forward.3} parent=5 // pred_check
      %p541 = pneg %p540
    $region42: #{residual_forward.3} parent=5 // pred_check_branch
      %543 = sbr.rel (%p541) target = $region44
    $region43: #{residual_forward.3} parent=5 // pred_region
      %s544 = ssub.s32 %s11, 2
      // Predicated region
      $region45: #{residual_forward.3} parent=43 // pred_check
        %p545 = pneg %p108
      $region46: #{residual_forward.3} parent=43 // pred_check_branch
        %547 = sbr.rel (%p545) target = $region48
      $region47: #{residual_forward.3} parent=43 // pred_region
        %s548 = smul.u32 2, %s17
        %p549 = scmp.lt.s32.totalorder %s548, 3
        %s550 = scalar_select %p549, %s548, 3
        %s551 = smul.addr %s550, 8
        %s552 = scalar_lea.vmem %s3, %s551
      $region48: #{residual_forward.3} parent=43 // pred_fallthru
        _
      // Predicated region
      $region49: #{residual_forward.3} parent=43 // pred_check
        %p553 = pneg %p134
      $region50: #{residual_forward.3} parent=43 // pred_check_branch
        %555 = sbr.rel (%p553) target = $region52
      $region51: #{residual_forward.3} parent=43 // pred_region
        %p556 = scmp.lt.s32.totalorder %s17, 1
        %s557 = scalar_select %p556, %s17, 1
        %s558 = smul.addr %s557, 2
        %s559 = smul.addr %s558, 8
        %s560 = scalar_lea.vmem %s4, %s559
      $region52: #{residual_forward.3} parent=43 // pred_fallthru
        _
    $region44: #{residual_forward.3} parent=5 // pred_fallthru
      _
  $region6: #{residual_forward.3} parent=0 // loop_footer
    %s15 = sadd.s32 1, %s11
  $region7: #{residual_forward.3} parent=0 // loop_footer_branch
    %10 = sbr.rel target = $region3
  $region8: #{residual_forward.3} parent=0 // loop_exit
    _

// kernel: residual_forward.5
$region0: #{residual_forward.5}
  #allocation0 [shape = 'u32[]', space=smem, size = 0x4, offset = 0x4, fixed_abs, tag = 'smem constant byte address 0x4 - core index']
  #allocation1 [shape = 'u32[144,128]{1,0:T(1,128)}', space=vmem, size = 0x12000, scoped, tag = 'internal scratch']
  %s0 = inlined_call_operand.vmem [shape: s32[1,256], index: 0, kind: input, shape index: {}]
  %s1 = inlined_call_operand.vmem [shape: f32[8,512], index: 1, kind: input, shape index: {}]
  %s2 = inlined_call_operand.vmem [shape: f32[4,512], index: 2, kind: input, shape index: {}]
  %s3 = inlined_call_operand.vmem [shape: f32[3,8,8], index: 3, kind: input, shape index: {}]
  %s4 = inlined_call_operand.vmem [shape: f32[8,1], index: 4, kind: input, shape index: {}]
  %s5 = inlined_call_operand.vmem [shape: f32[8,1], index: 5, kind: input, shape index: {}]
  %s6 = inlined_call_operand.vmem [shape: f32[8,1], index: 6, kind: input, shape index: {}]
  %s7 = inlined_call_operand.vmem [shape: f32[8,1], index: 7, kind: input, shape index: {}]
  %s8 = inlined_call_operand.vmem [shape: f32[8,4], index: 8, kind: input, shape index: {}]
  %s9 = inlined_call_operand.vmem [shape: f32[8,1], index: 9, kind: input, shape index: {}]
  %s10 = inlined_call_operand.hbm [shape: f32[8,512], index: 10, kind: output, shape index: {}]
  %s11 = sld [smem:[#allocation0]]
  $region73: #{residual_forward.5} parent=0
    _
  %s13 = ssub.s32 1, %s11
  %s14 = scalar_select 0, %s13, %s11
  $region1: #{residual_forward.5} parent=0
    #allocation2 [shape = 'u8[16384]{0}', space=vmem, size = 0x4000, scoped, tag = 'output window, operand 0']
    #allocation3 [shape = 's32[2]{0}', space=sflag, size = 0x8, scoped, tag = 'scoped memory for residual_forward.5']
    %15 = vsyncpa [#allocation3], 0
    %s16 = scalar_lea.sflag [#allocation3], 1
    %17 = vsyncpa %s16, 0
    loop: start=0, step=1, limit=4
    $region2: #{residual_forward.5} parent=1 // loop_pre_header
      _
    $region3: #{residual_forward.5} parent=1 // loop_header
      %s19 = sphi 0, %s23
      %p20 = scmp.ge.s32.totalorder %s19, 4
      %s27 = sphi 0, %s27
      %s29 = sphi 0, %s27
      %s30 = sphi 0, %s29
      %s44 = sphi 0, %s30
      %s50 = sphi 0, %s52
      %s53 = sphi 0, %s50
      %s54 = sphi 0, %s53
      %s70 = sphi 0, %s54
      %s76 = sphi 0, %s78
      %s79 = sphi 0, %s76
      %s80 = sphi 0, %s79
      %s96 = sphi 0, %s80
      %s100 = sphi 0, %s100
      %s102 = sphi 0, %s100
      %s103 = sphi 0, %s102
      %s117 = sphi 0, %s103
      %s121 = sphi 0, %s121
      %s123 = sphi 0, %s121
      %s124 = sphi 0, %s123
      %s138 = sphi 0, %s124
      %s142 = sphi 0, %s142
      %s144 = sphi 0, %s142
      %s145 = sphi 0, %s144
      %s159 = sphi 0, %s145
      %s163 = sphi 0, %s163
      %s165 = sphi 0, %s163
      %s166 = sphi 0, %s165
      %s180 = sphi 0, %s166
      %s184 = sphi 0, %s184
      %s186 = sphi 0, %s184
      %s187 = sphi 0, %s186
      %s201 = sphi 0, %s187
      %s205 = sphi 0, %s205
      %s207 = sphi 0, %s205
      %s208 = sphi 0, %s207
      %s222 = sphi 0, %s208
      %s226 = sphi 0, %s226
      %s228 = sphi 0, %s226
      %s229 = sphi 0, %s228
      %s243 = sphi 0, %s229
      %s249 = sphi 0, %s251
      %s252 = sphi 0, %s249
      %s253 = sphi 0, %s252
      %s269 = sphi 0, %s253
    $region4: #{residual_forward.5} parent=1 // loop_header_branch
      %22 = sbr.rel (%p20) target = $region8
    $region5: #{residual_forward.5} parent=1 // loop_body
      %s24 = ssub.s32 %s19, 1
      %s25 = ssub.s32 %s19, 2
      %s26 = sadd.s32 %s19, 1
      %s28 = sadd.s32 %s27, 1
      %p31 = scmp.eq.s32.totalorder %s19, 1
      %p32 = scmp.ne.s32.totalorder %s27, %s29
      %p33 = scmp.eq.s32.totalorder %s19, 0
      %p34 = por %p32, %p33
      %p35 = scmp.ne.s32.totalorder %s27, %s29
      %p36 = scmp.eq.s32.totalorder %s24, 1
      %p37 = por %p35, %p36
      %p38 = scmp.ne.s32.totalorder %s29, %s30
      %p39 = scmp.eq.s32.totalorder %s24, 0
      %p40 = por %p38, %p39
      %p41 = scmp.ne.s32.totalorder %s29, %s30
      %p42 = scmp.eq.s32.totalorder %s25, 1
      %p43 = por %p41, %p42
      %p45 = scmp.ne.s32.totalorder %s30, %s44
      %p46 = scmp.eq.s32.totalorder %s25, 0
      %p47 = por %p45, %p46
      %s48 = ssub.s32 %s19, %s26
      %p49 = scmp.eq.s32.totalorder %s48, 0
      %s51 = sadd.s32 %s50, 1
      %s52 = scalar_select %p49, %s50, %s51
      %p55 = pneg %p49
      %p56 = scmp.eq.s32.totalorder %s19, 1
      %p57 = por %p55, %p56
      %p58 = scmp.ne.s32.totalorder %s50, %s53
      %p59 = scmp.eq.s32.totalorder %s19, 0
      %p60 = por %p58, %p59
      %p61 = scmp.ne.s32.totalorder %s50, %s53
      %p62 = scmp.eq.s32.totalorder %s24, 1
      %p63 = por %p61, %p62
      %p64 = scmp.ne.s32.totalorder %s53, %s54
      %p65 = scmp.eq.s32.totalorder %s24, 0
      %p66 = por %p64, %p65
      %p67 = scmp.ne.s32.totalorder %s53, %s54
      %p68 = scmp.eq.s32.totalorder %s25, 1
      %p69 = por %p67, %p68
      %p71 = scmp.ne.s32.totalorder %s54, %s70
      %p72 = scmp.eq.s32.totalorder %s25, 0
      %p73 = por %p71, %p72
      %s74 = ssub.s32 %s19, %s26
      %p75 = scmp.eq.s32.totalorder %s74, 0
      %s77 = sadd.s32 %s76, 1
      %s78 = scalar_select %p75, %s76, %s77
      %p81 = pneg %p75
      %p82 = scmp.eq.s32.totalorder %s19, 1
      %p83 = por %p81, %p82
      %p84 = scmp.ne.s32.totalorder %s76, %s79
      %p85 = scmp.eq.s32.totalorder %s19, 0
      %p86 = por %p84, %p85
      %p87 = scmp.ne.s32.totalorder %s76, %s79
      %p88 = scmp.eq.s32.totalorder %s24, 1
      %p89 = por %p87, %p88
      %p90 = scmp.ne.s32.totalorder %s79, %s80
      %p91 = scmp.eq.s32.totalorder %s24, 0
      %p92 = por %p90, %p91
      %p93 = scmp.ne.s32.totalorder %s79, %s80
      %p94 = scmp.eq.s32.totalorder %s25, 1
      %p95 = por %p93, %p94
      %p97 = scmp.ne.s32.totalorder %s80, %s96
      %p98 = scmp.eq.s32.totalorder %s25, 0
      %p99 = por %p97, %p98
      %s101 = sadd.s32 %s100, 1
      %p104 = scmp.eq.s32.totalorder %s19, 1
      %p105 = scmp.ne.s32.totalorder %s100, %s102
      %p106 = scmp.eq.s32.totalorder %s19, 0
      %p107 = por %p105, %p106
      %p108 = scmp.ne.s32.totalorder %s100, %s102
      %p109 = scmp.eq.s32.totalorder %s24, 1
      %p110 = por %p108, %p109
      %p111 = scmp.ne.s32.totalorder %s102, %s103
      %p112 = scmp.eq.s32.totalorder %s24, 0
      %p113 = por %p111, %p112
      %p114 = scmp.ne.s32.totalorder %s102, %s103
      %p115 = scmp.eq.s32.totalorder %s25, 1
      %p116 = por %p114, %p115
      %p118 = scmp.ne.s32.totalorder %s103, %s117
      %p119 = scmp.eq.s32.totalorder %s25, 0
      %p120 = por %p118, %p119
      %s122 = sadd.s32 %s121, 1
      %p125 = scmp.eq.s32.totalorder %s19, 1
      %p126 = scmp.ne.s32.totalorder %s121, %s123
      %p127 = scmp.eq.s32.totalorder %s19, 0
      %p128 = por %p126, %p127
      %p129 = scmp.ne.s32.totalorder %s121, %s123
      %p130 = scmp.eq.s32.totalorder %s24, 1
      %p131 = por %p129, %p130
      %p132 = scmp.ne.s32.totalorder %s123, %s124
      %p133 = scmp.eq.s32.totalorder %s24, 0
      %p134 = por %p132, %p133
      %p135 = scmp.ne.s32.totalorder %s123, %s124
      %p136 = scmp.eq.s32.totalorder %s25, 1
      %p137 = por %p135, %p136
      %p139 = scmp.ne.s32.totalorder %s124, %s138
      %p140 = scmp.eq.s32.totalorder %s25, 0
      %p141 = por %p139, %p140
      %s143 = sadd.s32 %s142, 1
      %p146 = scmp.eq.s32.totalorder %s19, 1
      %p147 = scmp.ne.s32.totalorder %s142, %s144
      %p148 = scmp.eq.s32.totalorder %s19, 0
      %p149 = por %p147, %p148
      %p150 = scmp.ne.s32.totalorder %s142, %s144
      %p151 = scmp.eq.s32.totalorder %s24, 1
      %p152 = por %p150, %p151
      %p153 = scmp.ne.s32.totalorder %s144, %s145
      %p154 = scmp.eq.s32.totalorder %s24, 0
      %p155 = por %p153, %p154
      %p156 = scmp.ne.s32.totalorder %s144, %s145
      %p157 = scmp.eq.s32.totalorder %s25, 1
      %p158 = por %p156, %p157
      %p160 = scmp.ne.s32.totalorder %s145, %s159
      %p161 = scmp.eq.s32.totalorder %s25, 0
      %p162 = por %p160, %p161
      %s164 = sadd.s32 %s163, 1
      %p167 = scmp.eq.s32.totalorder %s19, 1
      %p168 = scmp.ne.s32.totalorder %s163, %s165
      %p169 = scmp.eq.s32.totalorder %s19, 0
      %p170 = por %p168, %p169
      %p171 = scmp.ne.s32.totalorder %s163, %s165
      %p172 = scmp.eq.s32.totalorder %s24, 1
      %p173 = por %p171, %p172
      %p174 = scmp.ne.s32.totalorder %s165, %s166
      %p175 = scmp.eq.s32.totalorder %s24, 0
      %p176 = por %p174, %p175
      %p177 = scmp.ne.s32.totalorder %s165, %s166
      %p178 = scmp.eq.s32.totalorder %s25, 1
      %p179 = por %p177, %p178
      %p181 = scmp.ne.s32.totalorder %s166, %s180
      %p182 = scmp.eq.s32.totalorder %s25, 0
      %p183 = por %p181, %p182
      %s185 = sadd.s32 %s184, 1
      %p188 = scmp.eq.s32.totalorder %s19, 1
      %p189 = scmp.ne.s32.totalorder %s184, %s186
      %p190 = scmp.eq.s32.totalorder %s19, 0
      %p191 = por %p189, %p190
      %p192 = scmp.ne.s32.totalorder %s184, %s186
      %p193 = scmp.eq.s32.totalorder %s24, 1
      %p194 = por %p192, %p193
      %p195 = scmp.ne.s32.totalorder %s186, %s187
      %p196 = scmp.eq.s32.totalorder %s24, 0
      %p197 = por %p195, %p196
      %p198 = scmp.ne.s32.totalorder %s186, %s187
      %p199 = scmp.eq.s32.totalorder %s25, 1
      %p200 = por %p198, %p199
      %p202 = scmp.ne.s32.totalorder %s187, %s201
      %p203 = scmp.eq.s32.totalorder %s25, 0
      %p204 = por %p202, %p203
      %s206 = sadd.s32 %s205, 1
      %p209 = scmp.eq.s32.totalorder %s19, 1
      %p210 = scmp.ne.s32.totalorder %s205, %s207
      %p211 = scmp.eq.s32.totalorder %s19, 0
      %p212 = por %p210, %p211
      %p213 = scmp.ne.s32.totalorder %s205, %s207
      %p214 = scmp.eq.s32.totalorder %s24, 1
      %p215 = por %p213, %p214
      %p216 = scmp.ne.s32.totalorder %s207, %s208
      %p217 = scmp.eq.s32.totalorder %s24, 0
      %p218 = por %p216, %p217
      %p219 = scmp.ne.s32.totalorder %s207, %s208
      %p220 = scmp.eq.s32.totalorder %s25, 1
      %p221 = por %p219, %p220
      %p223 = scmp.ne.s32.totalorder %s208, %s222
      %p224 = scmp.eq.s32.totalorder %s25, 0
      %p225 = por %p223, %p224
      %s227 = sadd.s32 %s226, 1
      %p230 = scmp.eq.s32.totalorder %s19, 1
      %p231 = scmp.ne.s32.totalorder %s226, %s228
      %p232 = scmp.eq.s32.totalorder %s19, 0
      %p233 = por %p231, %p232
      %p234 = scmp.ne.s32.totalorder %s226, %s228
      %p235 = scmp.eq.s32.totalorder %s24, 1
      %p236 = por %p234, %p235
      %p237 = scmp.ne.s32.totalorder %s228, %s229
      %p238 = scmp.eq.s32.totalorder %s24, 0
      %p239 = por %p237, %p238
      %p240 = scmp.ne.s32.totalorder %s228, %s229
      %p241 = scmp.eq.s32.totalorder %s25, 1
      %p242 = por %p240, %p241
      %p244 = scmp.ne.s32.totalorder %s229, %s243
      %p245 = scmp.eq.s32.totalorder %s25, 0
      %p246 = por %p244, %p245
      %s247 = ssub.s32 %s19, %s26
      %p248 = scmp.eq.s32.totalorder %s247, 0
      %s250 = sadd.s32 %s249, 1
      %s251 = scalar_select %p248, %s249, %s250
      %p254 = pneg %p248
      %p255 = scmp.eq.s32.totalorder %s19, 1
      %p256 = por %p254, %p255
      %p257 = scmp.ne.s32.totalorder %s249, %s252
      %p258 = scmp.eq.s32.totalorder %s19, 0
      %p259 = por %p257, %p258
      %p260 = scmp.ne.s32.totalorder %s249, %s252
      %p261 = scmp.eq.s32.totalorder %s24, 1
      %p262 = por %p260, %p261
      %p263 = scmp.ne.s32.totalorder %s252, %s253
      %p264 = scmp.eq.s32.totalorder %s24, 0
      %p265 = por %p263, %p264
      %p266 = scmp.ne.s32.totalorder %s252, %s253
      %p267 = scmp.eq.s32.totalorder %s25, 1
      %p268 = por %p266, %p267
      %p270 = scmp.ne.s32.totalorder %s253, %s269
      %p271 = scmp.eq.s32.totalorder %s25, 0
      %p272 = por %p270, %p271
      %p273 = scmp.le.s32.totalorder 1, %s19
      %p274 = scmp.lt.s32.totalorder %s19, 3
      %p275 = pnand %p273, %p274
      %p276 = pneg %p275
      // Predicated region
      $region9: #{residual_forward.5} parent=5 // pred_check
        _
      $region10: #{residual_forward.5} parent=5 // pred_check_branch
        %278 = sbr.rel (%p275) target = $region12
      $region11: #{residual_forward.5} parent=5 // pred_region
        %s279 = ssub.s32 %s19, 1
        // Predicated region
        $region13: #{residual_forward.5} parent=11 // pred_check
          %p280 = pneg %p40
        $region14: #{residual_forward.5} parent=11 // pred_check_branch
          %282 = sbr.rel (%p280) target = $region16
        $region15: #{residual_forward.5} parent=11 // pred_region
          _
        $region16: #{residual_forward.5} parent=11 // pred_fallthru
          _
        // Predicated region
        $region17: #{residual_forward.5} parent=11 // pred_check
          %p283 = pneg %p113
        $region18: #{residual_forward.5} parent=11 // pred_check_branch
          %285 = sbr.rel (%p283) target = $region20
        $region19: #{residual_forward.5} parent=11 // pred_region
          _
        $region20: #{residual_forward.5} parent=11 // pred_fallthru
          _
        // Predicated region
        $region21: #{residual_forward.5} parent=11 // pred_check
          %p286 = pneg %p134
        $region22: #{residual_forward.5} parent=11 // pred_check_branch
          %288 = sbr.rel (%p286) target = $region24
        $region23: #{residual_forward.5} parent=11 // pred_region
          _
        $region24: #{residual_forward.5} parent=11 // pred_fallthru
          _
        // Predicated region
        $region25: #{residual_forward.5} parent=11 // pred_check
          %p289 = pneg %p155
        $region26: #{residual_forward.5} parent=11 // pred_check_branch
          %291 = sbr.rel (%p289) target = $region28
        $region27: #{residual_forward.5} parent=11 // pred_region
          _
        $region28: #{residual_forward.5} parent=11 // pred_fallthru
          _
        // Predicated region
        $region29: #{residual_forward.5} parent=11 // pred_check
          %p292 = pneg %p176
        $region30: #{residual_forward.5} parent=11 // pred_check_branch
          %294 = sbr.rel (%p292) target = $region32
        $region31: #{residual_forward.5} parent=11 // pred_region
          _
        $region32: #{residual_forward.5} parent=11 // pred_fallthru
          _
        // Predicated region
        $region33: #{residual_forward.5} parent=11 // pred_check
          %p295 = pneg %p197
        $region34: #{residual_forward.5} parent=11 // pred_check_branch
          %297 = sbr.rel (%p295) target = $region36
        $region35: #{residual_forward.5} parent=11 // pred_region
          _
        $region36: #{residual_forward.5} parent=11 // pred_fallthru
          _
        // Predicated region
        $region37: #{residual_forward.5} parent=11 // pred_check
          %p298 = pneg %p218
        $region38: #{residual_forward.5} parent=11 // pred_check_branch
          %300 = sbr.rel (%p298) target = $region40
        $region39: #{residual_forward.5} parent=11 // pred_region
          _
        $region40: #{residual_forward.5} parent=11 // pred_fallthru
          _
        // Predicated region
        $region41: #{residual_forward.5} parent=11 // pred_check
          %p301 = pneg %p239
        $region42: #{residual_forward.5} parent=11 // pred_check_branch
          %303 = sbr.rel (%p301) target = $region44
        $region43: #{residual_forward.5} parent=11 // pred_region
          _
        $region44: #{residual_forward.5} parent=11 // pred_fallthru
          _
      $region12: #{residual_forward.5} parent=5 // pred_fallthru
        _
      %p304 = scmp.lt.s32.totalorder %s19, 2
      // Predicated region
      $region45: #{residual_forward.5} parent=5 // pred_check
        %p305 = pneg %p304
      $region46: #{residual_forward.5} parent=5 // pred_check_branch
        %307 = sbr.rel (%p305) target = $region48
      $region47: #{residual_forward.5} parent=5 // pred_region
        // Predicated region
        $region49: #{residual_forward.5} parent=47 // pred_check
          %p308 = pneg %p60
        $region50: #{residual_forward.5} parent=47 // pred_check_branch
          %310 = sbr.rel (%p308) target = $region52
        $region51: #{residual_forward.5} parent=47 // pred_region
          %s311 = smul.u32 2, %s19
          %p312 = scmp.lt.s32.totalorder %s311, 3
          %s313 = scalar_select %p312, %s311, 3
          %s314 = smul.addr %s313, 8
          %s315 = scalar_lea.vmem %s1, %s314
          %s316 = smul.u32 2, %s19
        $region52: #{residual_forward.5} parent=47 // pred_fallthru
          _
        // Predicated region
        $region53: #{residual_forward.5} parent=47 // pred_check
          %p317 = pneg %p86
        $region54: #{residual_forward.5} parent=47 // pred_check_branch
          %319 = sbr.rel (%p317) target = $region56
        $region55: #{residual_forward.5} parent=47 // pred_region
          %s320 = smul.u32 2, %s19
          %p321 = scmp.lt.s32.totalorder %s320, 3
          %s322 = scalar_select %p321, %s320, 3
          %s323 = smul.addr %s322, 4
          %s324 = scalar_lea.vmem %s2, %s323
          %s325 = smul.u32 2, %s19
        $region56: #{residual_forward.5} parent=47 // pred_fallthru
          _
      $region48: #{residual_forward.5} parent=5 // pred_fallthru
        _
      %p326 = scmp.le.s32.totalorder 1, %s19
      %p327 = scmp.lt.s32.totalorder %s19, 3
      %p328 = pnand %p326, %p327
      %p329 = pneg %p328
      // Predicated region
      $region57: #{residual_forward.5} parent=5 // pred_check
        _
      $region58: #{residual_forward.5} parent=5 // pred_check_branch
        %331 = sbr.rel (%p328) target = $region60
      $region59: #{residual_forward.5} parent=5 // pred_region
        %s332 = ssub.s32 %s19, 1
        %p333 = pneg %p40
        %p334 = pneg %p37
        %s335 = smul.u32 2, %s24
        %p336 = scmp.lt.s32.totalorder %s335, 3
        %s337 = scalar_select %p336, %s335, 3
        %s338 = smul.addr %s337, 8
        %s339 = scalar_lea.vmem %s1, %s338
        %p340 = pneg %p66
        %p341 = pneg %p63
        %s342 = smul.u32 2, %s24
        %p343 = scmp.lt.s32.totalorder %s342, 3
        %s344 = scalar_select %p343, %s342, 3
        %s345 = smul.addr %s344, 4
        %s346 = scalar_lea.vmem %s2, %s345
        %p347 = pneg %p92
        %p348 = pneg %p89
        %p349 = pneg %p113
        %p350 = pneg %p110
        %p351 = pneg %p134
        %p352 = pneg %p131
        %p353 = pneg %p155
        %p354 = pneg %p152
        %p355 = pneg %p176
        %p356 = pneg %p173
        %p357 = pneg %p197
        %p358 = pneg %p194
        %p359 = pneg %p218
        %p360 = pneg %p215
        %p361 = pneg %p239
        %p362 = pneg %p236
        %p363 = pneg %p265
        %p364 = pneg %p262
        %s365 = sand.u32 %s252, 1
        %s366 = scalar_lea.sflag [#allocation3], %s365
        %s367 = sand.u32 %s252, 1
        %s368 = smul.addr %s367, 16
        %s369 = scalar_lea.vmem [#allocation2], %s368
        %s370 = smul.u32 2, %s24
        %p371 = scmp.lt.s32.totalorder %s370, 3
        %s372 = scalar_select %p371, %s370, 3
        %s373 = smul.addr %s372, 8
        %s374 = scalar_lea.vmem %s1, %s373
        %s375 = smul.u32 2, %s24
        %s376 = smul.u32 2, %s24
        %p377 = scmp.lt.s32.totalorder %s376, 3
        %s378 = scalar_select %p377, %s376, 3
        %s379 = smul.addr %s378, 4
        %s380 = scalar_lea.vmem %s2, %s379
        %s381 = smul.u32 2, %s24
        %s382 = smul.u32 2, %s24
        %v383 = vld [vmem:[%s0] sm:$0x3]
        %vm384 = vcmp.ge.s32.totalorder %v383, 1
        %vm385 = vcmp.le.s32.totalorder %v383, 126
        %v386 = vld [vmem:[%s374] sm:$0xff]
        %v387 = vld [vmem:[%s374 + $0x8] sm:$0xff]
        %v388 = vld [vmem:[%s4] sm:$0xff]
        %390 = vset.pattern.permute.xlu0 0
        %391 = vperm.xlu0 %390, %v388
        %v392 = vpop.permute.xlu0 %391
        %v394 = vmul.f32 %v386, %v392
        %v395 = vmul.f32 %v387, %v392
        %v396 = vld [vmem:[%s5] sm:$0xff]
        %398 = vset.pattern.permute.xlu0 0
        %399 = vperm.xlu0 %398, %v396
        %v400 = vpop.permute.xlu0 %399
        %v402 = vadd.f32 %v394, %v400
        %v403 = vadd.f32 %v395, %v400
        %v404 = vmax.f32 %v402, 0.0
        %v405 = vmax.f32 %v403, 0.0
        %406 = vrot.lane.b32.xlu0 %v404, 1
        %v407 = vpop.permute.xlu0 %406
        %408 = vrot.lane.b32.xlu0 %v405, 1
        %v409 = vpop.permute.xlu0 %408
        %v410 = vlaneseq
        %v411 = vand.u32 %v410, 127
        %vm412 = vcmp.lt.s32.totalorder %v411, 1
        %v413 = vsel %vm412, %v407, %v409
        %v414 = vsel %vm412, %v409, %v407
        %415 = vrot.lane.b32.xlu0 %v404, 127
        %v416 = vpop.permute.xlu0 %415
        %417 = vrot.lane.b32.xlu0 %v405, 127
        %v418 = vpop.permute.xlu0 %417
        %vm419 = vcmp.lt.s32.totalorder %v411, 127
        %v420 = vsel %vm419, %v416, %v418
        %v421 = vsel %vm419, %v418, %v416
        %s422 = scalar_lea.vmem %s3, 8
        %v423 = vld [vmem:[%s422] sm:$0xff]
        %v424 = vld [vmem:[%s3] sm:$0xff]
        %v425 = vsel %vm384, 1, 0
        %v426 = vlaneseq
        %v427 = vshrl.u32 %v426, 7
        %v428 = vsub.s32 0, %v427
        %v429 = vrot.slane %v425, %v428
        %v430 = vlaneseq
        %v431 = vshrl.u32 %v430, 7
        %v432 = vsub.s32 1, %v431
        %v433 = vrot.slane %v425, %v432
        %vm434 = vcmp.eq.s32.totalorder %v429, 1
        %vm435 = vcmp.eq.s32.totalorder %v433, 1
        %v436 = vsel %vm434, %v414, 0.0
        %v437 = vsel %vm435, %v413, 0.0
        %vm438 = vcmask 64512
        %v440 = vsel %vm438, %v424, 0
        %442 = vmatprep.subr.mxu0 %v437
        %443 = vmatpush1.msra.mxu0 %v436
        %444 = vmatprep.subr.mxu0 0.0
        %445 = vmatpush1.msra.mxu0 0.0
        %446 = vmatprep.subr.mxu0 0.0
        %447 = vmatpush1.msra.mxu0 0.0
        %448 = vmatprep.subr.mxu0 0.0
        %449 = vmatpush1.msra.mxu0 0.0
        %450 = vmatprep.subr.mxu0 0.0
        %451 = vmatpush1.msra.mxu0 0.0
        %452 = vmatprep.subr.mxu0 0.0
        %453 = vmatpush1.msra.mxu0 0.0
        %454 = vmatprep.subr.mxu0 0.0
        %455 = vmatpush1.msra.mxu0 0.0
        %456 = vmatprep.subr.mxu0 0.0
        %457 = vmatpush1.msra.mxu0 0.0
        %458 = vmatprep.subr.mxu0 0.0
        %459 = vmatpush1.msra.mxu0 0.0
        %460 = vmatprep.subr.mxu0 0.0
        %461 = vmatpush1.msra.mxu0 0.0
        %462 = vmatprep.subr.mxu0 0.0
        %463 = vmatpush1.msra.mxu0 0.0
        %464 = vmatprep.subr.mxu0 0.0
        %465 = vmatpush1.msra.mxu0 0.0
        %466 = vmatprep.subr.mxu0 0.0
        %467 = vmatpush1.msra.mxu0 0.0
        %468 = vmatprep.subr.mxu0 0.0
        %469 = vmatpush1.msra.mxu0 0.0
        %470 = vmatprep.subr.mxu0 0.0
        %471 = vmatpush1.msra.mxu0 0.0
        %472 = vmatprep.subr.mxu0 0.0
        %473 = vmatpush1.msra.mxu0 0.0
        %474 = vmatprep.subr.mxu0 0.0
        %475 = vmatpush1.msra.mxu0 0.0
        %476 = vmatprep.subr.mxu0 0.0
        %477 = vmatpush1.msra.mxu0 0.0
        %478 = vmatprep.subr.mxu0 0.0
        %479 = vmatpush1.msra.mxu0 0.0
        %480 = vmatprep.subr.mxu0 0.0
        %481 = vmatpush1.msra.mxu0 0.0
        %482 = vmatprep.subr.mxu0 0.0
        %483 = vmatpush1.msra.mxu0 0.0
        %484 = vmatprep.subr.mxu0 0.0
        %485 = vmatpush1.msra.mxu0 0.0
        %486 = vmatprep.subr.mxu0 0.0
        %487 = vmatpush1.msra.mxu0 0.0
        %488 = vmatprep.subr.mxu0 0.0
        %489 = vmatpush1.msra.mxu0 0.0
        %490 = vmatprep.subr.mxu0 0.0
        %491 = vmatpush1.msra.mxu0 0.0
        %492 = vmatprep.subr.mxu0 0.0
        %493 = vmatpush1.msra.mxu0 0.0
        %494 = vmatprep.subr.mxu0 0.0
        %495 = vmatpush1.msra.mxu0 0.0
        %496 = vmatprep.subr.mxu0 0.0
        %497 = vmatpush1.msra.mxu0 0.0
        %498 = vmatprep.subr.mxu0 0.0
        %499 = vmatpush1.msra.mxu0 0.0
        %500 = vmatprep.subr.mxu0 0.0
        %501 = vmatpush1.msra.mxu0 0.0
        %502 = vmatprep.subr.mxu0 0.0
        %503 = vmatpush1.msra.mxu0 0.0
        %504 = vmatprep.subr.mxu0 0.0
        %505 = vmatpush1.msra.mxu0 0.0
        %506 = vmatprep.mubr.f32.mxu0 0.0
        %507 = vmatmul.mubr.f32.gmra.mrb[0].mxu0 %v440
        %v508 = vpop.f32.mrb[0].mxu0
        %v509 = vadd.f32 0.0, %v508
        %v510 = vpop.f32.mrb[0].mxu0
        %v511 = vadd.f32 0.0, %v510
        %512 = vdwg.mxu0
        %v514 = vsel %vm438, %v423, 0
        %516 = vmatprep.subr.mxu0 %v405
        %517 = vmatpush1.msra.mxu0 %v404
        %518 = vmatprep.subr.mxu0 0.0
        %519 = vmatpush1.msra.mxu0 0.0
        %520 = vmatprep.subr.mxu0 0.0
        %521 = vmatpush1.msra.mxu0 0.0
        %522 = vmatprep.subr.mxu0 0.0
        %523 = vmatpush1.msra.mxu0 0.0
        %524 = vmatprep.subr.mxu0 0.0
        %525 = vmatpush1.msra.mxu0 0.0
        %526 = vmatprep.subr.mxu0 0.0
        %527 = vmatpush1.msra.mxu0 0.0
        %528 = vmatprep.subr.mxu0 0.0
        %529 = vmatpush1.msra.mxu0 0.0
        %530 = vmatprep.subr.mxu0 0.0
        %531 = vmatpush1.msra.mxu0 0.0
        %532 = vmatprep.subr.mxu0 0.0
        %533 = vmatpush1.msra.mxu0 0.0
        %534 = vmatprep.subr.mxu0 0.0
        %535 = vmatpush1.msra.mxu0 0.0
        %536 = vmatprep.subr.mxu0 0.0
        %537 = vmatpush1.msra.mxu0 0.0
        %538 = vmatprep.subr.mxu0 0.0
        %539 = vmatpush1.msra.mxu0 0.0
        %540 = vmatprep.subr.mxu0 0.0
        %541 = vmatpush1.msra.mxu0 0.0
        %542 = vmatprep.subr.mxu0 0.0
        %543 = vmatpush1.msra.mxu0 0.0
        %544 = vmatprep.subr.mxu0 0.0
        %545 = vmatpush1.msra.mxu0 0.0
        %546 = vmatprep.subr.mxu0 0.0
        %547 = vmatpush1.msra.mxu0 0.0
        %548 = vmatprep.subr.mxu0 0.0
        %549 = vmatpush1.msra.mxu0 0.0
        %550 = vmatprep.subr.mxu0 0.0
        %551 = vmatpush1.msra.mxu0 0.0
        %552 = vmatprep.subr.mxu0 0.0
        %553 = vmatpush1.msra.mxu0 0.0
        %554 = vmatprep.subr.mxu0 0.0
        %555 = vmatpush1.msra.mxu0 0.0
        %556 = vmatprep.subr.mxu0 0.0
        %557 = vmatpush1.msra.mxu0 0.0
        %558 = vmatprep.subr.mxu0 0.0
        %559 = vmatpush1.msra.mxu0 0.0
        %560 = vmatprep.subr.mxu0 0.0
        %561 = vmatpush1.msra.mxu0 0.0
        %562 = vmatprep.subr.mxu0 0.0
        %563 = vmatpush1.msra.mxu0 0.0
        %564 = vmatprep.subr.mxu0 0.0
        %565 = vmatpush1.msra.mxu0 0.0
        %566 = vmatprep.subr.mxu0 0.0
        %567 = vmatpush1.msra.mxu0 0.0
        %568 = vmatprep.subr.mxu0 0.0
        %569 = vmatpush1.msra.mxu0 0.0
        %570 = vmatprep.subr.mxu0 0.0
        %571 = vmatpush1.msra.mxu0 0.0
        %572 = vmatprep.subr.mxu0 0.0
        %573 = vmatpush1.msra.mxu0 0.0
        %574 = vmatprep.subr.mxu0 0.0
        %575 = vmatpush1.msra.mxu0 0.0
        %576 = vmatprep.subr.mxu0 0.0
        %577 = vmatpush1.msra.mxu0 0.0
        %578 = vmatprep.subr.mxu0 0.0
        %579 = vmatpush1.msra.mxu0 0.0
        %580 = vmatprep.mubr.f32.mxu0 0.0
        %581 = vmatmul.mubr.f32.gmra.mrb[0].mxu0 %v514
        %v582 = vpop.f32.mrb[0].mxu0
        %v583 = vadd.f32 %v509, %v582
        %v584 = vpop.f32.mrb[0].mxu0
        %v585 = vadd.f32 %v511, %v584
        %586 = vdwg.mxu0
        %s587 = scalar_lea.vmem %s3, 16
        %v588 = vld [vmem:[%s587] sm:$0xff]
        %v589 = vsel %vm385, 1, 0
        %v590 = vlaneseq
        %v591 = vshrl.u32 %v590, 7
        %v592 = vsub.s32 0, %v591
        %v593 = vrot.slane %v589, %v592
        %v594 = vlaneseq
        %v595 = vshrl.u32 %v594, 7
        %v596 = vsub.s32 1, %v595
        %v597 = vrot.slane %v589, %v596
        %vm598 = vcmp.eq.s32.totalorder %v593, 1
        %vm599 = vcmp.eq.s32.totalorder %v597, 1
        %v600 = vsel %vm598, %v420, 0.0
        %v601 = vsel %vm599, %v421, 0.0
        %v603 = vsel %vm438, %v588, 0
        %605 = vmatprep.subr.mxu0 %v601
        %606 = vmatpush1.msra.mxu0 %v600
        %607 = vmatprep.subr.mxu0 0.0
        %608 = vmatpush1.msra.mxu0 0.0
        %609 = vmatprep.subr.mxu0 0.0
        %610 = vmatpush1.msra.mxu0 0.0
        %611 = vmatprep.subr.mxu0 0.0
        %612 = vmatpush1.msra.mxu0 0.0
        %613 = vmatprep.subr.mxu0 0.0
        %614 = vmatpush1.msra.mxu0 0.0
        %615 = vmatprep.subr.mxu0 0.0
        %616 = vmatpush1.msra.mxu0 0.0
        %617 = vmatprep.subr.mxu0 0.0
        %618 = vmatpush1.msra.mxu0 0.0
        %619 = vmatprep.subr.mxu0 0.0
        %620 = vmatpush1.msra.mxu0 0.0
        %621 = vmatprep.subr.mxu0 0.0
        %622 = vmatpush1.msra.mxu0 0.0
        %623 = vmatprep.subr.mxu0 0.0
        %624 = vmatpush1.msra.mxu0 0.0
        %625 = vmatprep.subr.mxu0 0.0
        %626 = vmatpush1.msra.mxu0 0.0
        %627 = vmatprep.subr.mxu0 0.0
        %628 = vmatpush1.msra.mxu0 0.0
        %629 = vmatprep.subr.mxu0 0.0
        %630 = vmatpush1.msra.mxu0 0.0
        %631 = vmatprep.subr.mxu0 0.0
        %632 = vmatpush1.msra.mxu0 0.0
        %633 = vmatprep.subr.mxu0 0.0
        %634 = vmatpush1.msra.mxu0 0.0
        %635 = vmatprep.subr.mxu0 0.0
        %636 = vmatpush1.msra.mxu0 0.0
        %637 = vmatprep.subr.mxu0 0.0
        %638 = vmatpush1.msra.mxu0 0.0
        %639 = vmatprep.subr.mxu0 0.0
        %640 = vmatpush1.msra.mxu0 0.0
        %641 = vmatprep.subr.mxu0 0.0
        %642 = vmatpush1.msra.mxu0 0.0
        %643 = vmatprep.subr.mxu0 0.0
        %644 = vmatpush1.msra.mxu0 0.0
        %645 = vmatprep.subr.mxu0 0.0
        %646 = vmatpush1.msra.mxu0 0.0
        %647 = vmatprep.subr.mxu0 0.0
        %648 = vmatpush1.msra.mxu0 0.0
        %649 = vmatprep.subr.mxu0 0.0
        %650 = vmatpush1.msra.mxu0 0.0
        %651 = vmatprep.subr.mxu0 0.0
        %652 = vmatpush1.msra.mxu0 0.0
        %653 = vmatprep.subr.mxu0 0.0
        %654 = vmatpush1.msra.mxu0 0.0
        %655 = vmatprep.subr.mxu0 0.0
        %656 = vmatpush1.msra.mxu0 0.0
        %657 = vmatprep.subr.mxu0 0.0
        %658 = vmatpush1.msra.mxu0 0.0
        %659 = vmatprep.subr.mxu0 0.0
        %660 = vmatpush1.msra.mxu0 0.0
        %661 = vmatprep.subr.mxu0 0.0
        %662 = vmatpush1.msra.mxu0 0.0
        %663 = vmatprep.subr.mxu0 0.0
        %664 = vmatpush1.msra.mxu0 0.0
        %665 = vmatprep.subr.mxu0 0.0
        %666 = vmatpush1.msra.mxu0 0.0
        %667 = vmatprep.subr.mxu0 0.0
        %668 = vmatpush1.msra.mxu0 0.0
        %669 = vmatprep.mubr.f32.mxu0 0.0
        %670 = vmatmul.mubr.f32.gmra.mrb[0].mxu0 %v603
        %v671 = vpop.f32.mrb[0].mxu0
        %v672 = vadd.f32 0.0, %v671
        %v673 = vpop.f32.mrb[0].mxu0
        %v674 = vadd.f32 0.0, %v673
        %675 = vdwg.mxu0
        %v676 = vadd.f32 %v583, %v672
        %v677 = vadd.f32 %v585, %v674
        %v678 = vld [vmem:[%s6] sm:$0xff]
        %680 = vset.pattern.permute.xlu0 0
        %681 = vperm.xlu0 %680, %v678
        %v682 = vpop.permute.xlu0 %681
        %v684 = vmul.f32 %v676, %v682
        %v685 = vmul.f32 %v677, %v682
        %v686 = vld [vmem:[%s7] sm:$0xff]
        %688 = vset.pattern.permute.xlu0 0
        %689 = vperm.xlu0 %688, %v686
        %v690 = vpop.permute.xlu0 %689
        %v692 = vadd.f32 %v684, %v690
        %v693 = vadd.f32 %v685, %v690
        %v694 = vld [vmem:[%s380] sm:$0xff]
        %v696 = vcombine.high %v694, %v694
        %698 = vrot.lane.b32.xlu0 %v694, 1
        %v699 = vpop.permute.xlu0 %698
        %700 = vrot.lane.b32.xlu0 %v696, 1
        %v701 = vpop.permute.xlu0 %700
        %v702 = vsel %vm412, %v699, %v701
        %v703 = vsel %vm412, %v701, %v699
        %704 = vrot.lane.b32.xlu0 %v694, 127
        %v705 = vpop.permute.xlu0 %704
        %706 = vrot.lane.b32.xlu0 %v696, 127
        %v707 = vpop.permute.xlu0 %706
        %v708 = vsel %vm419, %v705, %v707
        %v709 = vsel %vm419, %v707, %v705
        %v710 = vsel %vm434, %v703, -inf
        %v711 = vsel %vm435, %v702, -inf
        %v712 = vmax.f32 %v710, %v694
        %v713 = vmax.f32 %v711, %v696
        %v714 = vsel %vm598, %v708, -inf
        %v715 = vsel %vm599, %v709, -inf
        %v716 = vmax.f32 %v712, %v714
        %v717 = vmax.f32 %v713, %v715
        %v718 = vsel %vm434, %v703, 0.0
        %v719 = vsel %vm435, %v702, 0.0
        %v720 = vadd.f32 %v718, %v694
        %v721 = vadd.f32 %v719, %v696
        %v722 = vsel %vm598, %v708, 0.0
        %v723 = vsel %vm599, %v709, 0.0
        %v724 = vadd.f32 %v720, %v722
        %v725 = vadd.f32 %v721, %v723
        %v726 = vmul.f32 %v724, 0.33333334
        %v727 = vmul.f32 %v725, 0.33333334
        %v728 = vadd.f32 %v716, %v726
        %v729 = vadd.f32 %v717, %v727
        %v730 = vmul.f32 %v728, 0.5
        %v731 = vmul.f32 %v729, 0.5
        %v732 = vld [vmem:[%s8] sm:$0xff]
        %v733 = vld [vmem:[%s9] sm:$0xff]
        %735 = vset.pattern.permute.xlu0 0
        %736 = vperm.xlu0 %735, %v733
        %v737 = vpop.permute.xlu0 %736
        %vm739 = vcmask 31744
        %v741 = vsel %vm739, %v732, 0
        %vm743 = vcmask 1043456
        %v745 = vsel %vm743, %v730, 0
        %v748 = vsel %vm743, %v731, 0
        %750 = vmatprep.subr.mxu0 %v748
        %751 = vmatpush1.msra.mxu0 %v745
        %752 = vmatprep.subr.mxu0 0.0
        %753 = vmatpush1.msra.mxu0 0.0
        %754 = vmatprep.subr.mxu0 0.0
        %755 = vmatpush1.msra.mxu0 0.0
        %756 = vmatprep.subr.mxu0 0.0
        %757 = vmatpush1.msra.mxu0 0.0
        %758 = vmatprep.subr.mxu0 0.0
        %759 = vmatpush1.msra.mxu0 0.0
        %760 = vmatprep.subr.mxu0 0.0
        %761 = vmatpush1.msra.mxu0 0.0
        %762 = vmatprep.subr.mxu0 0.0
        %763 = vmatpush1.msra.mxu0 0.0
        %764 = vmatprep.subr.mxu0 0.0
        %765 = vmatpush1.msra.mxu0 0.0
        %766 = vmatprep.subr.mxu0 0.0
        %767 = vmatpush1.msra.mxu0 0.0
        %768 = vmatprep.subr.mxu0 0.0
        %769 = vmatpush1.msra.mxu0 0.0
        %770 = vmatprep.subr.mxu0 0.0
        %771 = vmatpush1.msra.mxu0 0.0
        %772 = vmatprep.subr.mxu0 0.0
        %773 = vmatpush1.msra.mxu0 0.0
        %774 = vmatprep.subr.mxu0 0.0
        %775 = vmatpush1.msra.mxu0 0.0
        %776 = vmatprep.subr.mxu0 0.0
        %777 = vmatpush1.msra.mxu0 0.0
        %778 = vmatprep.subr.mxu0 0.0
        %779 = vmatpush1.msra.mxu0 0.0
        %780 = vmatprep.subr.mxu0 0.0
        %781 = vmatpush1.msra.mxu0 0.0
        %782 = vmatprep.subr.mxu0 0.0
        %783 = vmatpush1.msra.mxu0 0.0
        %784 = vmatprep.subr.mxu0 0.0
        %785 = vmatpush1.msra.mxu0 0.0
        %786 = vmatprep.subr.mxu0 0.0
        %787 = vmatpush1.msra.mxu0 0.0
        %788 = vmatprep.subr.mxu0 0.0
        %789 = vmatpush1.msra.mxu0 0.0
        %790 = vmatprep.subr.mxu0 0.0
        %791 = vmatpush1.msra.mxu0 0.0
        %792 = vmatprep.subr.mxu0 0.0
        %793 = vmatpush1.msra.mxu0 0.0
        %794 = vmatprep.subr.mxu0 0.0
        %795 = vmatpush1.msra.mxu0 0.0
        %796 = vmatprep.subr.mxu0 0.0
        %797 = vmatpush1.msra.mxu0 0.0
        %798 = vmatprep.subr.mxu0 0.0
        %799 = vmatpush1.msra.mxu0 0.0
        %800 = vmatprep.subr.mxu0 0.0
        %801 = vmatpush1.msra.mxu0 0.0
        %802 = vmatprep.subr.mxu0 0.0
        %803 = vmatpush1.msra.mxu0 0.0
        %804 = vmatprep.subr.mxu0 0.0
        %805 = vmatpush1.msra.mxu0 0.0
        %806 = vmatprep.subr.mxu0 0.0
        %807 = vmatpush1.msra.mxu0 0.0
        %808 = vmatprep.subr.mxu0 0.0
        %809 = vmatpush1.msra.mxu0 0.0
        %810 = vmatprep.subr.mxu0 0.0
        %811 = vmatpush1.msra.mxu0 0.0
        %812 = vmatprep.subr.mxu0 0.0
        %813 = vmatpush1.msra.mxu0 0.0
        %814 = vmatprep.mubr.f32.mxu0 0.0
        %815 = vmatmul.mubr.f32.gmra.mrb[0].mxu0 %v741
        %v816 = vpop.f32.mrb[0].mxu0
        %v817 = vadd.f32 %v737, %v816
        %v818 = vpop.f32.mrb[0].mxu0
        %v819 = vadd.f32 %v737, %v818
        %820 = vdwg.mxu0
        %v821 = vadd.f32 %v692, %v817
        %v822 = vadd.f32 %v693, %v819
        %v823 = vmax.f32 %v821, 0.0
        %v824 = vmax.f32 %v822, 0.0
        %825 = vst [vmem:[%s369] sm:$0xff] %v823
        %826 = vst [vmem:[%s369 + $0x8] sm:$0xff] %v824
        %s827 = sand.u32 %s252, 1
        %s828 = scalar_lea.sflag [#allocation3], %s827
        %s829 = sand.u32 %s252, 1
        %s830 = smul.addr %s829, 16
        %s831 = scalar_lea.vmem [#allocation2], %s830
        // Predicated region
        $region61: #{residual_forward.5} parent=59 // pred_check
          %p832 = pneg %p262
        $region62: #{residual_forward.5} parent=59 // pred_check_branch
          %834 = sbr.rel (%p832) target = $region64
        $region63: #{residual_forward.5} parent=59 // pred_region
          %s835 = smul.u32 2, %s24
          %s837 = ssub.s32 256, 256
          %838 = vsyncadd %s828, %s837
          %s839 = smul.addr %s835, 128
          %s840 = scalar_lea.hbm %s10, %s839
          %s842 = sshll.u32 %s831, 4
          %s843 = int_to_ptr.vmem [resolvable:$true] %s842
          %845 = dma.vmem_to_hbm [thread:$0]  %s843, 256, %s840, %s828
        $region64: #{residual_forward.5} parent=59 // pred_fallthru
          _
      $region60: #{residual_forward.5} parent=5 // pred_fallthru
        _
      %p846 = scmp.le.s32.totalorder 2, %s19
      // Predicated region
      $region65: #{residual_forward.5} parent=5 // pred_check
        %p847 = pneg %p846
      $region66: #{residual_forward.5} parent=5 // pred_check_branch
        %849 = sbr.rel (%p847) target = $region68
      $region67: #{residual_forward.5} parent=5 // pred_region
        %s850 = ssub.s32 %s19, 2
        // Predicated region
        $region69: #{residual_forward.5} parent=67 // pred_check
          %p851 = pneg %p268
        $region70: #{residual_forward.5} parent=67 // pred_check_branch
          %853 = sbr.rel (%p851) target = $region72
        $region71: #{residual_forward.5} parent=67 // pred_region
          %s854 = sand.u32 %s253, 1
          %s855 = scalar_lea.sflag [#allocation3], %s854
          %s856 = sand.u32 %s253, 1
          %s857 = smul.addr %s856, 16
          %s858 = scalar_lea.vmem [#allocation2], %s857
          %859 = dma.done %s855, 256
        $region72: #{residual_forward.5} parent=67 // pred_fallthru
          _
      $region68: #{residual_forward.5} parent=5 // pred_fallthru
        _
    $region6: #{residual_forward.5} parent=1 // loop_footer
      %s23 = sadd.s32 1, %s19
    $region7: #{residual_forward.5} parent=1 // loop_footer_branch
      %18 = sbr.rel target = $region3
    $region8: #{residual_forward.5} parent=1 // loop_exit
      _
    %860 = vsyncpa [#allocation3], 1
    %s861 = scalar_lea.sflag [#allocation3], 1
    %862 = vsyncpa %s861, 1

</llo_original>
